<compile_context>
chip_gen: v5e
topology: v5e:2x2
jax: 0.10.0
libtpu: 0.0.40
codegen_flags: <defaults>
</compile_context>

<pallas_src>
import functools
import math

import jax
import jax.numpy as jnp
from jax.experimental import pallas as pl
from jax.experimental.pallas import tpu as pltpu

D_MODEL = 32
NHEAD = 4
HEAD_DIM = D_MODEL // NHEAD
DIM_FF = 64
EPS = 1e-5          # nn.LayerNorm default
NEG = -1e9          # large negative used instead of -inf for masking
SCALE = 1.0 / math.sqrt(HEAD_DIM)


# ------------------------- in-kernel helpers -------------------------------

def _layer_norm(x, gamma, beta):
    mu = jnp.mean(x, axis=-1, keepdims=True)
    var = jnp.mean((x - mu) ** 2, axis=-1, keepdims=True)
    return (x - mu) * jax.lax.rsqrt(var + EPS) * gamma + beta


def _softmax(s):
    s = s - jnp.max(s, axis=-1, keepdims=True)
    p = jnp.exp(s)
    return p * pl.reciprocal(jnp.sum(p, axis=-1, keepdims=True), approx=True)


def _attend_into(ctx_ref, row0, q2d, k2d, v2d, bias):
    """Per-head attention with static lane slices; writes the (Lq, D_MODEL) context
    into ctx_ref[row0:row0+Lq, :].  q2d: (Lq, D); k2d/v2d: (Lk, D); bias broadcastable
    to (Lq, Lk).  Everything stays 2-D (no reshapes/transposes inside the kernel)."""
    lq = q2d.shape[0]
    for h in range(NHEAD):
        lo, hi = h * HEAD_DIM, (h + 1) * HEAD_DIM
        s = jnp.einsum('qd,kd->qk', q2d[:, lo:hi], k2d[:, lo:hi],
                       preferred_element_type=jnp.float32) * SCALE
        p = _softmax(s + bias)
        ctx_ref[row0:row0 + lq, lo:hi] = jnp.dot(
            p, v2d[:, lo:hi], preferred_element_type=jnp.float32)


# ------------------------------- kernel ------------------------------------

def decoder_layer_kernel(tgt_ref, mem_ref, tmask_ref, tkpm_ref, mkpm_ref,
                         wqkv_ref, bqkv_ref, wsao_ref, wcaq_ref, wcakv_ref,
                         bcakv_ref, wcao_ref, w1_ref, b1_ref, w2_ref, vec_ref,
                         out_ref, ctx_ref):
    BB, T, D = tgt_ref.shape          # BB = per-invocation batch (B for no-grid, 1 for grid)
    S = mem_ref.shape[1]

    vec = vec_ref[...]                # (10, D) packed small vectors
    bcaq = vec[0:1]
    sa_bo, ca_bo, b2 = vec[1:2], vec[2:3], vec[3:4]
    g1, be1 = vec[4:5], vec[5:6]
    g2, be2 = vec[6:7], vec[7:8]
    g3, be3 = vec[8:9], vec[9:10]
    tmask = tmask_ref[...]            # (T, T) additive causal mask

    # Batch-major: each tgt_ref[b] / mem_ref[b] is one contiguous (rows, D) tile.
    if BB == 1:
        x0 = tgt_ref[0]                                                    # (T, D)
        mem = mem_ref[0]                                                   # (S, D)
    else:
        x0 = jnp.concatenate([tgt_ref[b] for b in range(BB)], axis=0)      # (BB*T, D)
        mem = jnp.concatenate([mem_ref[b] for b in range(BB)], axis=0)     # (BB*S, D)

    # 1) masked self-attention + residual + norm1 ---------------------------------
    # fused lane-dense QKV projection for all batches at once: (BB*T, D) @ (D, 3D)
    qkv = jnp.dot(x0, wqkv_ref[...], preferred_element_type=jnp.float32) + bqkv_ref[...]
    for b in range(BB):
        qkv_b = qkv[b * T:(b + 1) * T]                                     # (T, 3D)
        bias = tmask + tkpm_ref[b] * NEG                                   # (T, T)
        _attend_into(ctx_ref, b * T,
                     qkv_b[:, 0:D], qkv_b[:, D:2 * D], qkv_b[:, 2 * D:3 * D], bias)
    sa = jnp.dot(ctx_ref[...], wsao_ref[...],
                 preferred_element_type=jnp.float32) + sa_bo               # (BB*T, D)
    x1 = _layer_norm(x0 + sa, g1, be1)

    # 2) cross-attention (query = x1, key/value = memory) + residual + norm2 ------
    qca = jnp.dot(x1, wcaq_ref[...], preferred_element_type=jnp.float32) + bcaq
    kvca = jnp.dot(mem, wcakv_ref[...], preferred_element_type=jnp.float32) + bcakv_ref[...]
    for b in range(BB):
        q_b = qca[b * T:(b + 1) * T]                                       # (T, D)
        kv_b = kvca[b * S:(b + 1) * S]                                     # (S, 2D)
        bias = mkpm_ref[b] * NEG                                           # (1, S) broadcast
        _attend_into(ctx_ref, b * T, q_b, kv_b[:, 0:D], kv_b[:, D:2 * D], bias)
    ca = jnp.dot(ctx_ref[...], wcao_ref[...],
                 preferred_element_type=jnp.float32) + ca_bo
    x2 = _layer_norm(x1 + ca, g2, be2)

    # 3) position-wise FFN + residual + norm3 (dropout = identity, eval mode) -----
    h = jnp.maximum(
        jnp.dot(x2, w1_ref[...], preferred_element_type=jnp.float32) + b1_ref[...], 0.0)
    ff = jnp.dot(h, w2_ref[...], preferred_element_type=jnp.float32) + b2
    x3 = _layer_norm(x2 + ff, g3, be3)

    for b in range(BB):                # contiguous lane-dense (T, D) tile per batch
        out_ref[b] = x3[b * T:(b + 1) * T]


# ------------------------------- wrapper ------------------------------------

def _tensorcores_per_chip() -> int:
    """v7x has 2 TensorCores per chip; v5e/v6e have 1.  Defensive string check."""
    try:
        kind = jax.devices()[0].device_kind.lower()
    except Exception:
        return 1
    return 2 if ("v7" in kind or "tpu7" in kind) else 1


def _batched_spec(shape):
    ndim = len(shape)
    return pl.BlockSpec((1,) + tuple(shape[1:]),
                        lambda b: (b,) + (0,) * (ndim - 1))


def _resident_spec(shape):
    ndim = len(shape)
    return pl.BlockSpec(tuple(shape), lambda b: (0,) * ndim)


def _cost_estimate(B, T, S, operands, out_size):
    D, F, H, Hd = D_MODEL, DIM_FF, NHEAD, HEAD_DIM
    flops = 2 * B * (T * D * 3 * D          # self-attn QKV
                     + 2 * H * T * T * Hd   # self-attn scores + context
                     + T * D * D            # self-attn out proj
                     + T * D * D            # cross-attn Q
                     + S * D * 2 * D        # cross-attn KV
                     + 2 * H * T * S * Hd   # cross-attn scores + context
                     + T * D * D            # cross-attn out proj
                     + T * D * F + T * F * D)  # FFN
    transcendentals = B * H * T * (T + S) + 6 * B * T
    bytes_accessed = sum(int(op.size) * op.dtype.itemsize for op in operands) + out_size * 4
    return pl.CostEstimate(flops=int(flops), transcendentals=int(transcendentals),
                           bytes_accessed=int(bytes_accessed))


@functools.partial(jax.jit, static_argnames=("multicore",))
def custom_decoder_layer(tgt, memory, tgt_mask, tgt_key_padding_mask,
                         memory_key_padding_mask, params, multicore=None):
    """tgt: (T, B, D), memory: (S, B, D) -- PyTorch seq-first layout at the interface.
    tgt_mask: (T, T) additive float mask.
    tgt/memory key padding masks: (B, T) / (B, S) boolean, True = padding.
    multicore: None = auto-detect (grid over batch only on multi-TensorCore chips)."""
    T, B, D = tgt.shape
    S = memory.shape[0]
    if multicore is None:
        multicore = _tensorcores_per_chip() > 1
    use_grid = bool(multicore) and B > 1

    # ---- pack / fuse weights lane-dense on the wrapper side (y = x @ W + b) ----
    w_sa_qkv = jnp.concatenate([params["sa_wq"], params["sa_wk"], params["sa_wv"]], axis=1)  # (D,3D)
    b_sa_qkv = jnp.concatenate([params["sa_bq"], params["sa_bk"], params["sa_bv"]], axis=1)  # (1,3D)
    w_ca_kv = jnp.concatenate([params["ca_wk"], params["ca_wv"]], axis=1)                    # (D,2D)
    b_ca_kv = jnp.concatenate([params["ca_bk"], params["ca_bv"]], axis=1)                    # (1,2D)
    vecs = jnp.concatenate(
        [params["ca_bq"], params["sa_bo"], params["ca_bo"], params["b2"],
         params["g1"], params["be1"], params["g2"], params["be2"],
         params["g3"], params["be3"]], axis=0)                                               # (10,D)

    # ---- batch-major activations: contiguous per-batch (rows, D) tiles in-kernel ----
    tgt_bm = jnp.transpose(tgt, (1, 0, 2)).astype(jnp.float32)       # (B, T, D)
    mem_bm = jnp.transpose(memory, (1, 0, 2)).astype(jnp.float32)    # (B, S, D)
    tmask = tgt_mask.astype(jnp.float32)                             # (T, T)
    tkpm = tgt_key_padding_mask.astype(jnp.float32).reshape(B, 1, T)
    mkpm = memory_key_padding_mask.astype(jnp.float32).reshape(B, 1, S)

    operands = (tgt_bm, mem_bm, tmask, tkpm, mkpm,
                w_sa_qkv, b_sa_qkv, params["sa_wo"], params["ca_wq"],
                w_ca_kv, b_ca_kv, params["ca_wo"],
                params["w1"], params["b1"], params["w2"], vecs)

    cost = _cost_estimate(B, T, S, operands, B * T * D)

    if use_grid:
        # v7x: shard the batch over the two TensorCores; weights/masks use constant
        # index_maps so they stay resident in VMEM across grid steps (no re-DMA).
        in_specs = ([_batched_spec(tgt_bm.shape), _batched_spec(mem_bm.shape),
                     _resident_spec(tmask.shape),
                     _batched_spec(tkpm.shape), _batched_spec(mkpm.shape)]
                    + [_resident_spec(op.shape) for op in operands[5:]])
        out_bm = pl.pallas_call(
            decoder_layer_kernel,
            out_shape=jax.ShapeDtypeStruct((B, T, D), jnp.float32),
            grid=(B,),
            in_specs=in_specs,
            out_specs=_batched_spec((B, T, D)),
            scratch_shapes=[pltpu.VMEM((T, D), jnp.float32)],
            compiler_params=pltpu.CompilerParams(dimension_semantics=("parallel",)),
            cost_estimate=cost,
        )(*operands)
    else:
        # v5e / v6e (1 TensorCore): single invocation, everything pinned in VMEM,
        # position-wise work merged over the whole (B*T, D) slab inside the kernel.
        vmem = pl.BlockSpec(memory_space=pltpu.MemorySpace.VMEM)
        out_bm = pl.pallas_call(
            decoder_layer_kernel,
            out_shape=jax.ShapeDtypeStruct((B, T, D), jnp.float32),
            in_specs=[vmem] * len(operands),
            out_specs=vmem,
            scratch_shapes=[pltpu.VMEM((B * T, D), jnp.float32)],
            cost_estimate=cost,
        )(*operands)

    return jnp.transpose(out_bm, (1, 0, 2))     # back to PyTorch (T, B, D)


# -------------------------- deterministic params ----------------------------

def init_params(key):
    ks = iter(jax.random.split(key, 32))

    def lin(fan_in, fan_out):
        # nn.Linear-style init; weight stored pre-transposed (fan_in, fan_out)
        lim = 1.0 / math.sqrt(fan_in)
        w = jax.random.uniform(next(ks), (fan_in, fan_out), jnp.float32, -lim, lim)
        b = jax.random.uniform(next(ks), (1, fan_out), jnp.float32, -lim, lim)
        return w, b

    p = {}
    for pref in ("sa", "ca"):               # self-attn / cross-attn projections
        for name in ("wq", "wk", "wv", "wo"):
            w, b = lin(D_MODEL, D_MODEL)
            p[f"{pref}_{name}"] = w
            p[f"{pref}_b{name[-1]}"] = b
    p["w1"], p["b1"] = lin(D_MODEL, DIM_FF)
    p["w2"], p["b2"] = lin(DIM_FF, D_MODEL)
    for i in (1, 2, 3):                     # LayerNorm affine params
        p[f"g{i}"] = jnp.ones((1, D_MODEL), jnp.float32)
        p[f"be{i}"] = jnp.zeros((1, D_MODEL), jnp.float32)
    return p


# --------------------------------- main --------------------------------------

if __name__ == "__main__":
    key = jax.random.PRNGKey(0)
    k_tgt, k_mem, k_p = jax.random.split(key, 3)

    T, S, B = 8, 8, 2
    tgt = jax.random.normal(k_tgt, (T, B, D_MODEL), jnp.float32)
    memory = jax.random.normal(k_mem, (S, B, D_MODEL), jnp.float32)

    # causal (square subsequent) mask: 0 where allowed, NEG where future
    idx = jnp.arange(T)
    tgt_mask = jnp.where(idx[None, :] > idx[:, None], NEG, 0.0).astype(jnp.float32)

    # key padding masks: True = padded token
    tgt_kpm = jnp.zeros((B, T), jnp.bool_).at[1, T - 1].set(True)
    mem_kpm = jnp.zeros((B, S), jnp.bool_).at[0, S - 2:].set(True)

    params = init_params(k_p)

    # default path (auto-selects single-invocation on 1-TC chips, batch grid on v7x)
    out = custom_decoder_layer(tgt, memory, tgt_mask, tgt_kpm, mem_kpm, params)
    out = jax.block_until_ready(out)
    assert out.shape == (T, B, D_MODEL)
    assert bool(jnp.all(jnp.isfinite(out)))

    # exercise both code paths explicitly and check they agree
    out_single = jax.block_until_ready(
        custom_decoder_layer(tgt, memory, tgt_mask, tgt_kpm, mem_kpm, params, multicore=False))
    out_grid = jax.block_until_ready(
        custom_decoder_layer(tgt, memory, tgt_mask, tgt_kpm, mem_kpm, params, multicore=True))
    assert bool(jnp.allclose(out_single, out_grid, rtol=1e-5, atol=1e-5))

    print("KERNEL_OK")
</pallas_src>

<mosaic_0001>
module attributes {stable_mosaic.version = 11 : i64} {
  func.func @decoder_layer_kernel(%arg0: memref<2x8x32xf32, #tpu.memory_space<vmem>>, %arg1: memref<2x8x32xf32, #tpu.memory_space<vmem>>, %arg2: memref<8x8xf32, #tpu.memory_space<vmem>>, %arg3: memref<2x1x8xf32, #tpu.memory_space<vmem>>, %arg4: memref<2x1x8xf32, #tpu.memory_space<vmem>>, %arg5: memref<32x96xf32, #tpu.memory_space<vmem>>, %arg6: memref<1x96xf32, #tpu.memory_space<vmem>>, %arg7: memref<32x32xf32, #tpu.memory_space<vmem>>, %arg8: memref<32x32xf32, #tpu.memory_space<vmem>>, %arg9: memref<32x64xf32, #tpu.memory_space<vmem>>, %arg10: memref<1x64xf32, #tpu.memory_space<vmem>>, %arg11: memref<32x32xf32, #tpu.memory_space<vmem>>, %arg12: memref<32x64xf32, #tpu.memory_space<vmem>>, %arg13: memref<1x64xf32, #tpu.memory_space<vmem>>, %arg14: memref<64x32xf32, #tpu.memory_space<vmem>>, %arg15: memref<10x32xf32, #tpu.memory_space<vmem>>, %arg16: memref<2x8x32xf32, #tpu.memory_space<vmem>>, %arg17: memref<16x32xf32, #tpu.memory_space<vmem>>) attributes {dimension_semantics = [], scalar_prefetch = 0 : i64, scratch_operands = 1 : i64, tpu.core_type = #tpu.core_type<tc>} {
    %c0 = arith.constant 0 : index
    %c0_0 = arith.constant 0 : index
    %0 = vector.load %arg15[%c0, %c0_0] : memref<10x32xf32, #tpu.memory_space<vmem>>, vector<10x32xf32>
    %1 = vector.extract_strided_slice %0 {offsets = [0, 0], sizes = [1, 32], strides = [1, 1]} : vector<10x32xf32> to vector<1x32xf32>
    %2 = vector.extract_strided_slice %0 {offsets = [1, 0], sizes = [1, 32], strides = [1, 1]} : vector<10x32xf32> to vector<1x32xf32>
    %3 = vector.extract_strided_slice %0 {offsets = [2, 0], sizes = [1, 32], strides = [1, 1]} : vector<10x32xf32> to vector<1x32xf32>
    %4 = vector.extract_strided_slice %0 {offsets = [3, 0], sizes = [1, 32], strides = [1, 1]} : vector<10x32xf32> to vector<1x32xf32>
    %5 = vector.extract_strided_slice %0 {offsets = [4, 0], sizes = [1, 32], strides = [1, 1]} : vector<10x32xf32> to vector<1x32xf32>
    %6 = vector.extract_strided_slice %0 {offsets = [5, 0], sizes = [1, 32], strides = [1, 1]} : vector<10x32xf32> to vector<1x32xf32>
    %7 = vector.extract_strided_slice %0 {offsets = [6, 0], sizes = [1, 32], strides = [1, 1]} : vector<10x32xf32> to vector<1x32xf32>
    %8 = vector.extract_strided_slice %0 {offsets = [7, 0], sizes = [1, 32], strides = [1, 1]} : vector<10x32xf32> to vector<1x32xf32>
    %9 = vector.extract_strided_slice %0 {offsets = [8, 0], sizes = [1, 32], strides = [1, 1]} : vector<10x32xf32> to vector<1x32xf32>
    %10 = vector.extract_strided_slice %0 {offsets = [9, 0], sizes = [1, 32], strides = [1, 1]} : vector<10x32xf32> to vector<1x32xf32>
    %c0_1 = arith.constant 0 : index
    %c0_2 = arith.constant 0 : index
    %11 = vector.load %arg2[%c0_1, %c0_2] : memref<8x8xf32, #tpu.memory_space<vmem>>, vector<8x8xf32>
    %c0_3 = arith.constant 0 : index
    %c0_4 = arith.constant 0 : index
    %c0_5 = arith.constant 0 : index
    %12 = vector.load %arg0[%c0_3, %c0_4, %c0_5] : memref<2x8x32xf32, #tpu.memory_space<vmem>>, vector<1x8x32xf32>
    %13 = vector.shape_cast %12 : vector<1x8x32xf32> to vector<8x32xf32>
    %c1 = arith.constant 1 : index
    %c0_6 = arith.constant 0 : index
    %c0_7 = arith.constant 0 : index
    %14 = vector.load %arg0[%c1, %c0_6, %c0_7] : memref<2x8x32xf32, #tpu.memory_space<vmem>>, vector<1x8x32xf32>
    %15 = vector.shape_cast %14 : vector<1x8x32xf32> to vector<8x32xf32>
    %16 = tpu.concatenate %13, %15 in 0 : vector<8x32xf32>, vector<8x32xf32> -> vector<16x32xf32>
    %c0_8 = arith.constant 0 : index
    %c0_9 = arith.constant 0 : index
    %c0_10 = arith.constant 0 : index
    %17 = vector.load %arg1[%c0_8, %c0_9, %c0_10] : memref<2x8x32xf32, #tpu.memory_space<vmem>>, vector<1x8x32xf32>
    %18 = vector.shape_cast %17 : vector<1x8x32xf32> to vector<8x32xf32>
    %c1_11 = arith.constant 1 : index
    %c0_12 = arith.constant 0 : index
    %c0_13 = arith.constant 0 : index
    %19 = vector.load %arg1[%c1_11, %c0_12, %c0_13] : memref<2x8x32xf32, #tpu.memory_space<vmem>>, vector<1x8x32xf32>
    %20 = vector.shape_cast %19 : vector<1x8x32xf32> to vector<8x32xf32>
    %21 = tpu.concatenate %18, %20 in 0 : vector<8x32xf32>, vector<8x32xf32> -> vector<16x32xf32>
    %c0_14 = arith.constant 0 : index
    %c0_15 = arith.constant 0 : index
    %22 = vector.load %arg5[%c0_14, %c0_15] : memref<32x96xf32, #tpu.memory_space<vmem>>, vector<32x96xf32>
    %cst = arith.constant dense<0.000000e+00> : vector<16x96xf32>
    %23 = tpu.matmul %16, %22, %cst {dimension_numbers = #tpu.dot_dimension_numbers<[1], [0], [0], [1], [0, 0, 1, 1], [], []>} : vector<16x32xf32>, vector<32x96xf32>, vector<16x96xf32> -> vector<16x96xf32>
    %c0_16 = arith.constant 0 : index
    %c0_17 = arith.constant 0 : index
    %24 = vector.load %arg6[%c0_16, %c0_17] : memref<1x96xf32, #tpu.memory_space<vmem>>, vector<1x96xf32>
    %25 = vector.broadcast %24 : vector<1x96xf32> to vector<16x96xf32>
    %26 = arith.addf %23, %25 : vector<16x96xf32>
    %27 = vector.extract_strided_slice %26 {offsets = [0, 0], sizes = [8, 96], strides = [1, 1]} : vector<16x96xf32> to vector<8x96xf32>
    %c0_18 = arith.constant 0 : index
    %c0_19 = arith.constant 0 : index
    %c0_20 = arith.constant 0 : index
    %28 = vector.load %arg3[%c0_18, %c0_19, %c0_20] : memref<2x1x8xf32, #tpu.memory_space<vmem>>, vector<1x1x8xf32>
    %29 = vector.shape_cast %28 : vector<1x1x8xf32> to vector<1x8xf32>
    %cst_21 = arith.constant -1.000000e+09 : f32
    %30 = vector.broadcast %cst_21 : f32 to vector<1x8xf32>
    %31 = arith.mulf %29, %30 : vector<1x8xf32>
    %32 = vector.broadcast %31 : vector<1x8xf32> to vector<8x8xf32>
    %33 = arith.addf %11, %32 : vector<8x8xf32>
    %34 = vector.extract_strided_slice %27 {offsets = [0, 0], sizes = [8, 32], strides = [1, 1]} : vector<8x96xf32> to vector<8x32xf32>
    %35 = vector.extract_strided_slice %27 {offsets = [0, 32], sizes = [8, 32], strides = [1, 1]} : vector<8x96xf32> to vector<8x32xf32>
    %36 = vector.extract_strided_slice %27 {offsets = [0, 64], sizes = [8, 32], strides = [1, 1]} : vector<8x96xf32> to vector<8x32xf32>
    %37 = vector.extract_strided_slice %34 {offsets = [0, 0], sizes = [8, 8], strides = [1, 1]} : vector<8x32xf32> to vector<8x8xf32>
    %38 = vector.extract_strided_slice %35 {offsets = [0, 0], sizes = [8, 8], strides = [1, 1]} : vector<8x32xf32> to vector<8x8xf32>
    "tpu.trace_start"() <{level = 10 : i32, message = "qd,kd->qk"}> : () -> ()
    %cst_22 = arith.constant dense<0.000000e+00> : vector<8x8xf32>
    %39 = tpu.matmul %37, %38, %cst_22 {dimension_numbers = #tpu.dot_dimension_numbers<[1], [1], [0], [0], [0, 0, 1, 0], [], []>} : vector<8x8xf32>, vector<8x8xf32>, vector<8x8xf32> -> vector<8x8xf32>
    "tpu.trace_stop"() : () -> ()
    %cst_23 = arith.constant 0.353553385 : f32
    %40 = vector.broadcast %cst_23 : f32 to vector<8x8xf32>
    %41 = arith.mulf %39, %40 : vector<8x8xf32>
    %42 = arith.addf %41, %33 : vector<8x8xf32>
    %cst_24 = arith.constant dense<0xFF800000> : vector<8xf32>
    %43 = vector.multi_reduction <maximumf>, %42, %cst_24 [1] : vector<8x8xf32> to vector<8xf32>
    %44 = vector.shape_cast %43 : vector<8xf32> to vector<8x1xf32>
    %45 = vector.broadcast %44 : vector<8x1xf32> to vector<8x8xf32>
    %46 = arith.subf %42, %45 : vector<8x8xf32>
    %47 = math.exp %46 : vector<8x8xf32>
    %cst_25 = arith.constant dense<0.000000e+00> : vector<8xf32>
    %48 = vector.multi_reduction <add>, %47, %cst_25 [1] : vector<8x8xf32> to vector<8xf32>
    %49 = vector.shape_cast %48 : vector<8xf32> to vector<8x1xf32>
    %50 = tpu.reciprocal %49 {approx = true} : vector<8x1xf32> -> vector<8x1xf32>
    %51 = vector.broadcast %50 : vector<8x1xf32> to vector<8x8xf32>
    %52 = arith.mulf %47, %51 : vector<8x8xf32>
    %53 = vector.extract_strided_slice %36 {offsets = [0, 0], sizes = [8, 8], strides = [1, 1]} : vector<8x32xf32> to vector<8x8xf32>
    %cst_26 = arith.constant dense<0.000000e+00> : vector<8x8xf32>
    %54 = tpu.matmul %52, %53, %cst_26 {dimension_numbers = #tpu.dot_dimension_numbers<[1], [0], [0], [1], [0, 0, 1, 1], [], []>} : vector<8x8xf32>, vector<8x8xf32>, vector<8x8xf32> -> vector<8x8xf32>
    %c0_27 = arith.constant 0 : index
    %c0_28 = arith.constant 0 : index
    %55 = vector.load %arg17[%c0_27, %c0_28] : memref<16x32xf32, #tpu.memory_space<vmem>>, vector<8x8xf32>
    tpu.vector_store %arg17[%c0_27, %c0_28], %54 {strides = array<i32>} : memref<16x32xf32, #tpu.memory_space<vmem>>, vector<8x8xf32>,
    %56 = vector.extract_strided_slice %34 {offsets = [0, 8], sizes = [8, 8], strides = [1, 1]} : vector<8x32xf32> to vector<8x8xf32>
    %57 = vector.extract_strided_slice %35 {offsets = [0, 8], sizes = [8, 8], strides = [1, 1]} : vector<8x32xf32> to vector<8x8xf32>
    "tpu.trace_start"() <{level = 10 : i32, message = "qd,kd->qk"}> : () -> ()
    %cst_29 = arith.constant dense<0.000000e+00> : vector<8x8xf32>
    %58 = tpu.matmul %56, %57, %cst_29 {dimension_numbers = #tpu.dot_dimension_numbers<[1], [1], [0], [0], [0, 0, 1, 0], [], []>} : vector<8x8xf32>, vector<8x8xf32>, vector<8x8xf32> -> vector<8x8xf32>
    "tpu.trace_stop"() : () -> ()
    %cst_30 = arith.constant 0.353553385 : f32
    %59 = vector.broadcast %cst_30 : f32 to vector<8x8xf32>
    %60 = arith.mulf %58, %59 : vector<8x8xf32>
    %61 = arith.addf %60, %33 : vector<8x8xf32>
    %cst_31 = arith.constant dense<0xFF800000> : vector<8xf32>
    %62 = vector.multi_reduction <maximumf>, %61, %cst_31 [1] : vector<8x8xf32> to vector<8xf32>
    %63 = vector.shape_cast %62 : vector<8xf32> to vector<8x1xf32>
    %64 = vector.broadcast %63 : vector<8x1xf32> to vector<8x8xf32>
    %65 = arith.subf %61, %64 : vector<8x8xf32>
    %66 = math.exp %65 : vector<8x8xf32>
    %cst_32 = arith.constant dense<0.000000e+00> : vector<8xf32>
    %67 = vector.multi_reduction <add>, %66, %cst_32 [1] : vector<8x8xf32> to vector<8xf32>
    %68 = vector.shape_cast %67 : vector<8xf32> to vector<8x1xf32>
    %69 = tpu.reciprocal %68 {approx = true} : vector<8x1xf32> -> vector<8x1xf32>
    %70 = vector.broadcast %69 : vector<8x1xf32> to vector<8x8xf32>
    %71 = arith.mulf %66, %70 : vector<8x8xf32>
    %72 = vector.extract_strided_slice %36 {offsets = [0, 8], sizes = [8, 8], strides = [1, 1]} : vector<8x32xf32> to vector<8x8xf32>
    %cst_33 = arith.constant dense<0.000000e+00> : vector<8x8xf32>
    %73 = tpu.matmul %71, %72, %cst_33 {dimension_numbers = #tpu.dot_dimension_numbers<[1], [0], [0], [1], [0, 0, 1, 1], [], []>} : vector<8x8xf32>, vector<8x8xf32>, vector<8x8xf32> -> vector<8x8xf32>
    %c0_34 = arith.constant 0 : index
    %c8 = arith.constant 8 : index
    %74 = vector.load %arg17[%c0_34, %c8] : memref<16x32xf32, #tpu.memory_space<vmem>>, vector<8x8xf32>
    tpu.vector_store %arg17[%c0_34, %c8], %73 {strides = array<i32>} : memref<16x32xf32, #tpu.memory_space<vmem>>, vector<8x8xf32>,
    %75 = vector.extract_strided_slice %34 {offsets = [0, 16], sizes = [8, 8], strides = [1, 1]} : vector<8x32xf32> to vector<8x8xf32>
    %76 = vector.extract_strided_slice %35 {offsets = [0, 16], sizes = [8, 8], strides = [1, 1]} : vector<8x32xf32> to vector<8x8xf32>
    "tpu.trace_start"() <{level = 10 : i32, message = "qd,kd->qk"}> : () -> ()
    %cst_35 = arith.constant dense<0.000000e+00> : vector<8x8xf32>
    %77 = tpu.matmul %75, %76, %cst_35 {dimension_numbers = #tpu.dot_dimension_numbers<[1], [1], [0], [0], [0, 0, 1, 0], [], []>} : vector<8x8xf32>, vector<8x8xf32>, vector<8x8xf32> -> vector<8x8xf32>
    "tpu.trace_stop"() : () -> ()
    %cst_36 = arith.constant 0.353553385 : f32
    %78 = vector.broadcast %cst_36 : f32 to vector<8x8xf32>
    %79 = arith.mulf %77, %78 : vector<8x8xf32>
    %80 = arith.addf %79, %33 : vector<8x8xf32>
    %cst_37 = arith.constant dense<0xFF800000> : vector<8xf32>
    %81 = vector.multi_reduction <maximumf>, %80, %cst_37 [1] : vector<8x8xf32> to vector<8xf32>
    %82 = vector.shape_cast %81 : vector<8xf32> to vector<8x1xf32>
    %83 = vector.broadcast %82 : vector<8x1xf32> to vector<8x8xf32>
    %84 = arith.subf %80, %83 : vector<8x8xf32>
    %85 = math.exp %84 : vector<8x8xf32>
    %cst_38 = arith.constant dense<0.000000e+00> : vector<8xf32>
    %86 = vector.multi_reduction <add>, %85, %cst_38 [1] : vector<8x8xf32> to vector<8xf32>
    %87 = vector.shape_cast %86 : vector<8xf32> to vector<8x1xf32>
    %88 = tpu.reciprocal %87 {approx = true} : vector<8x1xf32> -> vector<8x1xf32>
    %89 = vector.broadcast %88 : vector<8x1xf32> to vector<8x8xf32>
    %90 = arith.mulf %85, %89 : vector<8x8xf32>
    %91 = vector.extract_strided_slice %36 {offsets = [0, 16], sizes = [8, 8], strides = [1, 1]} : vector<8x32xf32> to vector<8x8xf32>
    %cst_39 = arith.constant dense<0.000000e+00> : vector<8x8xf32>
    %92 = tpu.matmul %90, %91, %cst_39 {dimension_numbers = #tpu.dot_dimension_numbers<[1], [0], [0], [1], [0, 0, 1, 1], [], []>} : vector<8x8xf32>, vector<8x8xf32>, vector<8x8xf32> -> vector<8x8xf32>
    %c0_40 = arith.constant 0 : index
    %c16 = arith.constant 16 : index
    %93 = vector.load %arg17[%c0_40, %c16] : memref<16x32xf32, #tpu.memory_space<vmem>>, vector<8x8xf32>
    tpu.vector_store %arg17[%c0_40, %c16], %92 {strides = array<i32>} : memref<16x32xf32, #tpu.memory_space<vmem>>, vector<8x8xf32>,
    %94 = vector.extract_strided_slice %34 {offsets = [0, 24], sizes = [8, 8], strides = [1, 1]} : vector<8x32xf32> to vector<8x8xf32>
    %95 = vector.extract_strided_slice %35 {offsets = [0, 24], sizes = [8, 8], strides = [1, 1]} : vector<8x32xf32> to vector<8x8xf32>
    "tpu.trace_start"() <{level = 10 : i32, message = "qd,kd->qk"}> : () -> ()
    %cst_41 = arith.constant dense<0.000000e+00> : vector<8x8xf32>
    %96 = tpu.matmul %94, %95, %cst_41 {dimension_numbers = #tpu.dot_dimension_numbers<[1], [1], [0], [0], [0, 0, 1, 0], [], []>} : vector<8x8xf32>, vector<8x8xf32>, vector<8x8xf32> -> vector<8x8xf32>
    "tpu.trace_stop"() : () -> ()
    %cst_42 = arith.constant 0.353553385 : f32
    %97 = vector.broadcast %cst_42 : f32 to vector<8x8xf32>
    %98 = arith.mulf %96, %97 : vector<8x8xf32>
    %99 = arith.addf %98, %33 : vector<8x8xf32>
    %cst_43 = arith.constant dense<0xFF800000> : vector<8xf32>
    %100 = vector.multi_reduction <maximumf>, %99, %cst_43 [1] : vector<8x8xf32> to vector<8xf32>
    %101 = vector.shape_cast %100 : vector<8xf32> to vector<8x1xf32>
    %102 = vector.broadcast %101 : vector<8x1xf32> to vector<8x8xf32>
    %103 = arith.subf %99, %102 : vector<8x8xf32>
    %104 = math.exp %103 : vector<8x8xf32>
    %cst_44 = arith.constant dense<0.000000e+00> : vector<8xf32>
    %105 = vector.multi_reduction <add>, %104, %cst_44 [1] : vector<8x8xf32> to vector<8xf32>
    %106 = vector.shape_cast %105 : vector<8xf32> to vector<8x1xf32>
    %107 = tpu.reciprocal %106 {approx = true} : vector<8x1xf32> -> vector<8x1xf32>
    %108 = vector.broadcast %107 : vector<8x1xf32> to vector<8x8xf32>
    %109 = arith.mulf %104, %108 : vector<8x8xf32>
    %110 = vector.extract_strided_slice %36 {offsets = [0, 24], sizes = [8, 8], strides = [1, 1]} : vector<8x32xf32> to vector<8x8xf32>
    %cst_45 = arith.constant dense<0.000000e+00> : vector<8x8xf32>
    %111 = tpu.matmul %109, %110, %cst_45 {dimension_numbers = #tpu.dot_dimension_numbers<[1], [0], [0], [1], [0, 0, 1, 1], [], []>} : vector<8x8xf32>, vector<8x8xf32>, vector<8x8xf32> -> vector<8x8xf32>
    %c0_46 = arith.constant 0 : index
    %c24 = arith.constant 24 : index
    %112 = vector.load %arg17[%c0_46, %c24] : memref<16x32xf32, #tpu.memory_space<vmem>>, vector<8x8xf32>
    tpu.vector_store %arg17[%c0_46, %c24], %111 {strides = array<i32>} : memref<16x32xf32, #tpu.memory_space<vmem>>, vector<8x8xf32>,
    %113 = vector.extract_strided_slice %26 {offsets = [8, 0], sizes = [8, 96], strides = [1, 1]} : vector<16x96xf32> to vector<8x96xf32>
    %c1_47 = arith.constant 1 : index
    %c0_48 = arith.constant 0 : index
    %c0_49 = arith.constant 0 : index
    %114 = vector.load %arg3[%c1_47, %c0_48, %c0_49] : memref<2x1x8xf32, #tpu.memory_space<vmem>>, vector<1x1x8xf32>
    %115 = vector.shape_cast %114 : vector<1x1x8xf32> to vector<1x8xf32>
    %cst_50 = arith.constant -1.000000e+09 : f32
    %116 = vector.broadcast %cst_50 : f32 to vector<1x8xf32>
    %117 = arith.mulf %115, %116 : vector<1x8xf32>
    %118 = vector.broadcast %117 : vector<1x8xf32> to vector<8x8xf32>
    %119 = arith.addf %11, %118 : vector<8x8xf32>
    %120 = vector.extract_strided_slice %113 {offsets = [0, 0], sizes = [8, 32], strides = [1, 1]} : vector<8x96xf32> to vector<8x32xf32>
    %121 = vector.extract_strided_slice %113 {offsets = [0, 32], sizes = [8, 32], strides = [1, 1]} : vector<8x96xf32> to vector<8x32xf32>
    %122 = vector.extract_strided_slice %113 {offsets = [0, 64], sizes = [8, 32], strides = [1, 1]} : vector<8x96xf32> to vector<8x32xf32>
    %123 = vector.extract_strided_slice %120 {offsets = [0, 0], sizes = [8, 8], strides = [1, 1]} : vector<8x32xf32> to vector<8x8xf32>
    %124 = vector.extract_strided_slice %121 {offsets = [0, 0], sizes = [8, 8], strides = [1, 1]} : vector<8x32xf32> to vector<8x8xf32>
    "tpu.trace_start"() <{level = 10 : i32, message = "qd,kd->qk"}> : () -> ()
    %cst_51 = arith.constant dense<0.000000e+00> : vector<8x8xf32>
    %125 = tpu.matmul %123, %124, %cst_51 {dimension_numbers = #tpu.dot_dimension_numbers<[1], [1], [0], [0], [0, 0, 1, 0], [], []>} : vector<8x8xf32>, vector<8x8xf32>, vector<8x8xf32> -> vector<8x8xf32>
    "tpu.trace_stop"() : () -> ()
    %cst_52 = arith.constant 0.353553385 : f32
    %126 = vector.broadcast %cst_52 : f32 to vector<8x8xf32>
    %127 = arith.mulf %125, %126 : vector<8x8xf32>
    %128 = arith.addf %127, %119 : vector<8x8xf32>
    %cst_53 = arith.constant dense<0xFF800000> : vector<8xf32>
    %129 = vector.multi_reduction <maximumf>, %128, %cst_53 [1] : vector<8x8xf32> to vector<8xf32>
    %130 = vector.shape_cast %129 : vector<8xf32> to vector<8x1xf32>
    %131 = vector.broadcast %130 : vector<8x1xf32> to vector<8x8xf32>
    %132 = arith.subf %128, %131 : vector<8x8xf32>
    %133 = math.exp %132 : vector<8x8xf32>
    %cst_54 = arith.constant dense<0.000000e+00> : vector<8xf32>
    %134 = vector.multi_reduction <add>, %133, %cst_54 [1] : vector<8x8xf32> to vector<8xf32>
    %135 = vector.shape_cast %134 : vector<8xf32> to vector<8x1xf32>
    %136 = tpu.reciprocal %135 {approx = true} : vector<8x1xf32> -> vector<8x1xf32>
    %137 = vector.broadcast %136 : vector<8x1xf32> to vector<8x8xf32>
    %138 = arith.mulf %133, %137 : vector<8x8xf32>
    %139 = vector.extract_strided_slice %122 {offsets = [0, 0], sizes = [8, 8], strides = [1, 1]} : vector<8x32xf32> to vector<8x8xf32>
    %cst_55 = arith.constant dense<0.000000e+00> : vector<8x8xf32>
    %140 = tpu.matmul %138, %139, %cst_55 {dimension_numbers = #tpu.dot_dimension_numbers<[1], [0], [0], [1], [0, 0, 1, 1], [], []>} : vector<8x8xf32>, vector<8x8xf32>, vector<8x8xf32> -> vector<8x8xf32>
    %c8_56 = arith.constant 8 : index
    %c0_57 = arith.constant 0 : index
    %141 = vector.load %arg17[%c8_56, %c0_57] : memref<16x32xf32, #tpu.memory_space<vmem>>, vector<8x8xf32>
    tpu.vector_store %arg17[%c8_56, %c0_57], %140 {strides = array<i32>} : memref<16x32xf32, #tpu.memory_space<vmem>>, vector<8x8xf32>,
    %142 = vector.extract_strided_slice %120 {offsets = [0, 8], sizes = [8, 8], strides = [1, 1]} : vector<8x32xf32> to vector<8x8xf32>
    %143 = vector.extract_strided_slice %121 {offsets = [0, 8], sizes = [8, 8], strides = [1, 1]} : vector<8x32xf32> to vector<8x8xf32>
    "tpu.trace_start"() <{level = 10 : i32, message = "qd,kd->qk"}> : () -> ()
    %cst_58 = arith.constant dense<0.000000e+00> : vector<8x8xf32>
    %144 = tpu.matmul %142, %143, %cst_58 {dimension_numbers = #tpu.dot_dimension_numbers<[1], [1], [0], [0], [0, 0, 1, 0], [], []>} : vector<8x8xf32>, vector<8x8xf32>, vector<8x8xf32> -> vector<8x8xf32>
    "tpu.trace_stop"() : () -> ()
    %cst_59 = arith.constant 0.353553385 : f32
    %145 = vector.broadcast %cst_59 : f32 to vector<8x8xf32>
    %146 = arith.mulf %144, %145 : vector<8x8xf32>
    %147 = arith.addf %146, %119 : vector<8x8xf32>
    %cst_60 = arith.constant dense<0xFF800000> : vector<8xf32>
    %148 = vector.multi_reduction <maximumf>, %147, %cst_60 [1] : vector<8x8xf32> to vector<8xf32>
    %149 = vector.shape_cast %148 : vector<8xf32> to vector<8x1xf32>
    %150 = vector.broadcast %149 : vector<8x1xf32> to vector<8x8xf32>
    %151 = arith.subf %147, %150 : vector<8x8xf32>
    %152 = math.exp %151 : vector<8x8xf32>
    %cst_61 = arith.constant dense<0.000000e+00> : vector<8xf32>
    %153 = vector.multi_reduction <add>, %152, %cst_61 [1] : vector<8x8xf32> to vector<8xf32>
    %154 = vector.shape_cast %153 : vector<8xf32> to vector<8x1xf32>
    %155 = tpu.reciprocal %154 {approx = true} : vector<8x1xf32> -> vector<8x1xf32>
    %156 = vector.broadcast %155 : vector<8x1xf32> to vector<8x8xf32>
    %157 = arith.mulf %152, %156 : vector<8x8xf32>
    %158 = vector.extract_strided_slice %122 {offsets = [0, 8], sizes = [8, 8], strides = [1, 1]} : vector<8x32xf32> to vector<8x8xf32>
    %cst_62 = arith.constant dense<0.000000e+00> : vector<8x8xf32>
    %159 = tpu.matmul %157, %158, %cst_62 {dimension_numbers = #tpu.dot_dimension_numbers<[1], [0], [0], [1], [0, 0, 1, 1], [], []>} : vector<8x8xf32>, vector<8x8xf32>, vector<8x8xf32> -> vector<8x8xf32>
    %c8_63 = arith.constant 8 : index
    %c8_64 = arith.constant 8 : index
    %160 = vector.load %arg17[%c8_63, %c8_64] : memref<16x32xf32, #tpu.memory_space<vmem>>, vector<8x8xf32>
    tpu.vector_store %arg17[%c8_63, %c8_64], %159 {strides = array<i32>} : memref<16x32xf32, #tpu.memory_space<vmem>>, vector<8x8xf32>,
    %161 = vector.extract_strided_slice %120 {offsets = [0, 16], sizes = [8, 8], strides = [1, 1]} : vector<8x32xf32> to vector<8x8xf32>
    %162 = vector.extract_strided_slice %121 {offsets = [0, 16], sizes = [8, 8], strides = [1, 1]} : vector<8x32xf32> to vector<8x8xf32>
    "tpu.trace_start"() <{level = 10 : i32, message = "qd,kd->qk"}> : () -> ()
    %cst_65 = arith.constant dense<0.000000e+00> : vector<8x8xf32>
    %163 = tpu.matmul %161, %162, %cst_65 {dimension_numbers = #tpu.dot_dimension_numbers<[1], [1], [0], [0], [0, 0, 1, 0], [], []>} : vector<8x8xf32>, vector<8x8xf32>, vector<8x8xf32> -> vector<8x8xf32>
    "tpu.trace_stop"() : () -> ()
    %cst_66 = arith.constant 0.353553385 : f32
    %164 = vector.broadcast %cst_66 : f32 to vector<8x8xf32>
    %165 = arith.mulf %163, %164 : vector<8x8xf32>
    %166 = arith.addf %165, %119 : vector<8x8xf32>
    %cst_67 = arith.constant dense<0xFF800000> : vector<8xf32>
    %167 = vector.multi_reduction <maximumf>, %166, %cst_67 [1] : vector<8x8xf32> to vector<8xf32>
    %168 = vector.shape_cast %167 : vector<8xf32> to vector<8x1xf32>
    %169 = vector.broadcast %168 : vector<8x1xf32> to vector<8x8xf32>
    %170 = arith.subf %166, %169 : vector<8x8xf32>
    %171 = math.exp %170 : vector<8x8xf32>
    %cst_68 = arith.constant dense<0.000000e+00> : vector<8xf32>
    %172 = vector.multi_reduction <add>, %171, %cst_68 [1] : vector<8x8xf32> to vector<8xf32>
    %173 = vector.shape_cast %172 : vector<8xf32> to vector<8x1xf32>
    %174 = tpu.reciprocal %173 {approx = true} : vector<8x1xf32> -> vector<8x1xf32>
    %175 = vector.broadcast %174 : vector<8x1xf32> to vector<8x8xf32>
    %176 = arith.mulf %171, %175 : vector<8x8xf32>
    %177 = vector.extract_strided_slice %122 {offsets = [0, 16], sizes = [8, 8], strides = [1, 1]} : vector<8x32xf32> to vector<8x8xf32>
    %cst_69 = arith.constant dense<0.000000e+00> : vector<8x8xf32>
    %178 = tpu.matmul %176, %177, %cst_69 {dimension_numbers = #tpu.dot_dimension_numbers<[1], [0], [0], [1], [0, 0, 1, 1], [], []>} : vector<8x8xf32>, vector<8x8xf32>, vector<8x8xf32> -> vector<8x8xf32>
    %c8_70 = arith.constant 8 : index
    %c16_71 = arith.constant 16 : index
    %179 = vector.load %arg17[%c8_70, %c16_71] : memref<16x32xf32, #tpu.memory_space<vmem>>, vector<8x8xf32>
    tpu.vector_store %arg17[%c8_70, %c16_71], %178 {strides = array<i32>} : memref<16x32xf32, #tpu.memory_space<vmem>>, vector<8x8xf32>,
    %180 = vector.extract_strided_slice %120 {offsets = [0, 24], sizes = [8, 8], strides = [1, 1]} : vector<8x32xf32> to vector<8x8xf32>
    %181 = vector.extract_strided_slice %121 {offsets = [0, 24], sizes = [8, 8], strides = [1, 1]} : vector<8x32xf32> to vector<8x8xf32>
    "tpu.trace_start"() <{level = 10 : i32, message = "qd,kd->qk"}> : () -> ()
    %cst_72 = arith.constant dense<0.000000e+00> : vector<8x8xf32>
    %182 = tpu.matmul %180, %181, %cst_72 {dimension_numbers = #tpu.dot_dimension_numbers<[1], [1], [0], [0], [0, 0, 1, 0], [], []>} : vector<8x8xf32>, vector<8x8xf32>, vector<8x8xf32> -> vector<8x8xf32>
    "tpu.trace_stop"() : () -> ()
    %cst_73 = arith.constant 0.353553385 : f32
    %183 = vector.broadcast %cst_73 : f32 to vector<8x8xf32>
    %184 = arith.mulf %182, %183 : vector<8x8xf32>
    %185 = arith.addf %184, %119 : vector<8x8xf32>
    %cst_74 = arith.constant dense<0xFF800000> : vector<8xf32>
    %186 = vector.multi_reduction <maximumf>, %185, %cst_74 [1] : vector<8x8xf32> to vector<8xf32>
    %187 = vector.shape_cast %186 : vector<8xf32> to vector<8x1xf32>
    %188 = vector.broadcast %187 : vector<8x1xf32> to vector<8x8xf32>
    %189 = arith.subf %185, %188 : vector<8x8xf32>
    %190 = math.exp %189 : vector<8x8xf32>
    %cst_75 = arith.constant dense<0.000000e+00> : vector<8xf32>
    %191 = vector.multi_reduction <add>, %190, %cst_75 [1] : vector<8x8xf32> to vector<8xf32>
    %192 = vector.shape_cast %191 : vector<8xf32> to vector<8x1xf32>
    %193 = tpu.reciprocal %192 {approx = true} : vector<8x1xf32> -> vector<8x1xf32>
    %194 = vector.broadcast %193 : vector<8x1xf32> to vector<8x8xf32>
    %195 = arith.mulf %190, %194 : vector<8x8xf32>
    %196 = vector.extract_strided_slice %122 {offsets = [0, 24], sizes = [8, 8], strides = [1, 1]} : vector<8x32xf32> to vector<8x8xf32>
    %cst_76 = arith.constant dense<0.000000e+00> : vector<8x8xf32>
    %197 = tpu.matmul %195, %196, %cst_76 {dimension_numbers = #tpu.dot_dimension_numbers<[1], [0], [0], [1], [0, 0, 1, 1], [], []>} : vector<8x8xf32>, vector<8x8xf32>, vector<8x8xf32> -> vector<8x8xf32>
    %c8_77 = arith.constant 8 : index
    %c24_78 = arith.constant 24 : index
    %198 = vector.load %arg17[%c8_77, %c24_78] : memref<16x32xf32, #tpu.memory_space<vmem>>, vector<8x8xf32>
    tpu.vector_store %arg17[%c8_77, %c24_78], %197 {strides = array<i32>} : memref<16x32xf32, #tpu.memory_space<vmem>>, vector<8x8xf32>,
    %c0_79 = arith.constant 0 : index
    %c0_80 = arith.constant 0 : index
    %199 = vector.load %arg17[%c0_79, %c0_80] : memref<16x32xf32, #tpu.memory_space<vmem>>, vector<16x32xf32>
    %c0_81 = arith.constant 0 : index
    %c0_82 = arith.constant 0 : index
    %200 = vector.load %arg7[%c0_81, %c0_82] : memref<32x32xf32, #tpu.memory_space<vmem>>, vector<32x32xf32>
    %cst_83 = arith.constant dense<0.000000e+00> : vector<16x32xf32>
    %201 = tpu.matmul %199, %200, %cst_83 {dimension_numbers = #tpu.dot_dimension_numbers<[1], [0], [0], [1], [0, 0, 1, 1], [], []>} : vector<16x32xf32>, vector<32x32xf32>, vector<16x32xf32> -> vector<16x32xf32>
    %202 = vector.broadcast %2 : vector<1x32xf32> to vector<16x32xf32>
    %203 = arith.addf %201, %202 : vector<16x32xf32>
    %204 = arith.addf %16, %203 : vector<16x32xf32>
    %cst_84 = arith.constant dense<0.000000e+00> : vector<16xf32>
    %205 = vector.multi_reduction <add>, %204, %cst_84 [1] : vector<16x32xf32> to vector<16xf32>
    %206 = vector.shape_cast %205 : vector<16xf32> to vector<16x1xf32>
    %cst_85 = arith.constant 3.200000e+01 : f32
    %207 = vector.broadcast %cst_85 : f32 to vector<16x1xf32>
    %208 = arith.divf %206, %207 : vector<16x1xf32>
    %209 = vector.broadcast %208 : vector<16x1xf32> to vector<16x32xf32>
    %210 = arith.subf %204, %209 : vector<16x32xf32>
    %211 = arith.mulf %210, %210 : vector<16x32xf32>
    %cst_86 = arith.constant dense<0.000000e+00> : vector<16xf32>
    %212 = vector.multi_reduction <add>, %211, %cst_86 [1] : vector<16x32xf32> to vector<16xf32>
    %213 = vector.shape_cast %212 : vector<16xf32> to vector<16x1xf32>
    %cst_87 = arith.constant 3.200000e+01 : f32
    %214 = vector.broadcast %cst_87 : f32 to vector<16x1xf32>
    %215 = arith.divf %213, %214 : vector<16x1xf32>
    %216 = vector.broadcast %208 : vector<16x1xf32> to vector<16x32xf32>
    %217 = arith.subf %204, %216 : vector<16x32xf32>
    %cst_88 = arith.constant 9.99999974E-6 : f32
    %218 = vector.broadcast %cst_88 : f32 to vector<16x1xf32>
    %219 = arith.addf %215, %218 : vector<16x1xf32>
    %220 = math.rsqrt %219 : vector<16x1xf32>
    %221 = vector.broadcast %220 : vector<16x1xf32> to vector<16x32xf32>
    %222 = arith.mulf %217, %221 : vector<16x32xf32>
    %223 = vector.broadcast %5 : vector<1x32xf32> to vector<16x32xf32>
    %224 = arith.mulf %222, %223 : vector<16x32xf32>
    %225 = vector.broadcast %6 : vector<1x32xf32> to vector<16x32xf32>
    %226 = arith.addf %224, %225 : vector<16x32xf32>
    %c0_89 = arith.constant 0 : index
    %c0_90 = arith.constant 0 : index
    %227 = vector.load %arg8[%c0_89, %c0_90] : memref<32x32xf32, #tpu.memory_space<vmem>>, vector<32x32xf32>
    %cst_91 = arith.constant dense<0.000000e+00> : vector<16x32xf32>
    %228 = tpu.matmul %226, %227, %cst_91 {dimension_numbers = #tpu.dot_dimension_numbers<[1], [0], [0], [1], [0, 0, 1, 1], [], []>} : vector<16x32xf32>, vector<32x32xf32>, vector<16x32xf32> -> vector<16x32xf32>
    %229 = vector.broadcast %1 : vector<1x32xf32> to vector<16x32xf32>
    %230 = arith.addf %228, %229 : vector<16x32xf32>
    %c0_92 = arith.constant 0 : index
    %c0_93 = arith.constant 0 : index
    %231 = vector.load %arg9[%c0_92, %c0_93] : memref<32x64xf32, #tpu.memory_space<vmem>>, vector<32x64xf32>
    %cst_94 = arith.constant dense<0.000000e+00> : vector<16x64xf32>
    %232 = tpu.matmul %21, %231, %cst_94 {dimension_numbers = #tpu.dot_dimension_numbers<[1], [0], [0], [1], [0, 0, 1, 1], [], []>} : vector<16x32xf32>, vector<32x64xf32>, vector<16x64xf32> -> vector<16x64xf32>
    %c0_95 = arith.constant 0 : index
    %c0_96 = arith.constant 0 : index
    %233 = vector.load %arg10[%c0_95, %c0_96] : memref<1x64xf32, #tpu.memory_space<vmem>>, vector<1x64xf32>
    %234 = vector.broadcast %233 : vector<1x64xf32> to vector<16x64xf32>
    %235 = arith.addf %232, %234 : vector<16x64xf32>
    %236 = vector.extract_strided_slice %230 {offsets = [0, 0], sizes = [8, 32], strides = [1, 1]} : vector<16x32xf32> to vector<8x32xf32>
    %237 = vector.extract_strided_slice %235 {offsets = [0, 0], sizes = [8, 64], strides = [1, 1]} : vector<16x64xf32> to vector<8x64xf32>
    %c0_97 = arith.constant 0 : index
    %c0_98 = arith.constant 0 : index
    %c0_99 = arith.constant 0 : index
    %238 = vector.load %arg4[%c0_97, %c0_98, %c0_99] : memref<2x1x8xf32, #tpu.memory_space<vmem>>, vector<1x1x8xf32>
    %239 = vector.shape_cast %238 : vector<1x1x8xf32> to vector<1x8xf32>
    %cst_100 = arith.constant -1.000000e+09 : f32
    %240 = vector.broadcast %cst_100 : f32 to vector<1x8xf32>
    %241 = arith.mulf %239, %240 : vector<1x8xf32>
    %242 = vector.extract_strided_slice %237 {offsets = [0, 0], sizes = [8, 32], strides = [1, 1]} : vector<8x64xf32> to vector<8x32xf32>
    %243 = vector.extract_strided_slice %237 {offsets = [0, 32], sizes = [8, 32], strides = [1, 1]} : vector<8x64xf32> to vector<8x32xf32>
    %244 = vector.extract_strided_slice %236 {offsets = [0, 0], sizes = [8, 8], strides = [1, 1]} : vector<8x32xf32> to vector<8x8xf32>
    %245 = vector.extract_strided_slice %242 {offsets = [0, 0], sizes = [8, 8], strides = [1, 1]} : vector<8x32xf32> to vector<8x8xf32>
    "tpu.trace_start"() <{level = 10 : i32, message = "qd,kd->qk"}> : () -> ()
    %cst_101 = arith.constant dense<0.000000e+00> : vector<8x8xf32>
    %246 = tpu.matmul %244, %245, %cst_101 {dimension_numbers = #tpu.dot_dimension_numbers<[1], [1], [0], [0], [0, 0, 1, 0], [], []>} : vector<8x8xf32>, vector<8x8xf32>, vector<8x8xf32> -> vector<8x8xf32>
    "tpu.trace_stop"() : () -> ()
    %cst_102 = arith.constant 0.353553385 : f32
    %247 = vector.broadcast %cst_102 : f32 to vector<8x8xf32>
    %248 = arith.mulf %246, %247 : vector<8x8xf32>
    %249 = vector.broadcast %241 : vector<1x8xf32> to vector<8x8xf32>
    %250 = arith.addf %248, %249 : vector<8x8xf32>
    %cst_103 = arith.constant dense<0xFF800000> : vector<8xf32>
    %251 = vector.multi_reduction <maximumf>, %250, %cst_103 [1] : vector<8x8xf32> to vector<8xf32>
    %252 = vector.shape_cast %251 : vector<8xf32> to vector<8x1xf32>
    %253 = vector.broadcast %252 : vector<8x1xf32> to vector<8x8xf32>
    %254 = arith.subf %250, %253 : vector<8x8xf32>
    %255 = math.exp %254 : vector<8x8xf32>
    %cst_104 = arith.constant dense<0.000000e+00> : vector<8xf32>
    %256 = vector.multi_reduction <add>, %255, %cst_104 [1] : vector<8x8xf32> to vector<8xf32>
    %257 = vector.shape_cast %256 : vector<8xf32> to vector<8x1xf32>
    %258 = tpu.reciprocal %257 {approx = true} : vector<8x1xf32> -> vector<8x1xf32>
    %259 = vector.broadcast %258 : vector<8x1xf32> to vector<8x8xf32>
    %260 = arith.mulf %255, %259 : vector<8x8xf32>
    %261 = vector.extract_strided_slice %243 {offsets = [0, 0], sizes = [8, 8], strides = [1, 1]} : vector<8x32xf32> to vector<8x8xf32>
    %cst_105 = arith.constant dense<0.000000e+00> : vector<8x8xf32>
    %262 = tpu.matmul %260, %261, %cst_105 {dimension_numbers = #tpu.dot_dimension_numbers<[1], [0], [0], [1], [0, 0, 1, 1], [], []>} : vector<8x8xf32>, vector<8x8xf32>, vector<8x8xf32> -> vector<8x8xf32>
    %c0_106 = arith.constant 0 : index
    %c0_107 = arith.constant 0 : index
    %263 = vector.load %arg17[%c0_106, %c0_107] : memref<16x32xf32, #tpu.memory_space<vmem>>, vector<8x8xf32>
    tpu.vector_store %arg17[%c0_106, %c0_107], %262 {strides = array<i32>} : memref<16x32xf32, #tpu.memory_space<vmem>>, vector<8x8xf32>,
    %264 = vector.extract_strided_slice %236 {offsets = [0, 8], sizes = [8, 8], strides = [1, 1]} : vector<8x32xf32> to vector<8x8xf32>
    %265 = vector.extract_strided_slice %242 {offsets = [0, 8], sizes = [8, 8], strides = [1, 1]} : vector<8x32xf32> to vector<8x8xf32>
    "tpu.trace_start"() <{level = 10 : i32, message = "qd,kd->qk"}> : () -> ()
    %cst_108 = arith.constant dense<0.000000e+00> : vector<8x8xf32>
    %266 = tpu.matmul %264, %265, %cst_108 {dimension_numbers = #tpu.dot_dimension_numbers<[1], [1], [0], [0], [0, 0, 1, 0], [], []>} : vector<8x8xf32>, vector<8x8xf32>, vector<8x8xf32> -> vector<8x8xf32>
    "tpu.trace_stop"() : () -> ()
    %cst_109 = arith.constant 0.353553385 : f32
    %267 = vector.broadcast %cst_109 : f32 to vector<8x8xf32>
    %268 = arith.mulf %266, %267 : vector<8x8xf32>
    %269 = vector.broadcast %241 : vector<1x8xf32> to vector<8x8xf32>
    %270 = arith.addf %268, %269 : vector<8x8xf32>
    %cst_110 = arith.constant dense<0xFF800000> : vector<8xf32>
    %271 = vector.multi_reduction <maximumf>, %270, %cst_110 [1] : vector<8x8xf32> to vector<8xf32>
    %272 = vector.shape_cast %271 : vector<8xf32> to vector<8x1xf32>
    %273 = vector.broadcast %272 : vector<8x1xf32> to vector<8x8xf32>
    %274 = arith.subf %270, %273 : vector<8x8xf32>
    %275 = math.exp %274 : vector<8x8xf32>
    %cst_111 = arith.constant dense<0.000000e+00> : vector<8xf32>
    %276 = vector.multi_reduction <add>, %275, %cst_111 [1] : vector<8x8xf32> to vector<8xf32>
    %277 = vector.shape_cast %276 : vector<8xf32> to vector<8x1xf32>
    %278 = tpu.reciprocal %277 {approx = true} : vector<8x1xf32> -> vector<8x1xf32>
    %279 = vector.broadcast %278 : vector<8x1xf32> to vector<8x8xf32>
    %280 = arith.mulf %275, %279 : vector<8x8xf32>
    %281 = vector.extract_strided_slice %243 {offsets = [0, 8], sizes = [8, 8], strides = [1, 1]} : vector<8x32xf32> to vector<8x8xf32>
    %cst_112 = arith.constant dense<0.000000e+00> : vector<8x8xf32>
    %282 = tpu.matmul %280, %281, %cst_112 {dimension_numbers = #tpu.dot_dimension_numbers<[1], [0], [0], [1], [0, 0, 1, 1], [], []>} : vector<8x8xf32>, vector<8x8xf32>, vector<8x8xf32> -> vector<8x8xf32>
    %c0_113 = arith.constant 0 : index
    %c8_114 = arith.constant 8 : index
    %283 = vector.load %arg17[%c0_113, %c8_114] : memref<16x32xf32, #tpu.memory_space<vmem>>, vector<8x8xf32>
    tpu.vector_store %arg17[%c0_113, %c8_114], %282 {strides = array<i32>} : memref<16x32xf32, #tpu.memory_space<vmem>>, vector<8x8xf32>,
    %284 = vector.extract_strided_slice %236 {offsets = [0, 16], sizes = [8, 8], strides = [1, 1]} : vector<8x32xf32> to vector<8x8xf32>
    %285 = vector.extract_strided_slice %242 {offsets = [0, 16], sizes = [8, 8], strides = [1, 1]} : vector<8x32xf32> to vector<8x8xf32>
    "tpu.trace_start"() <{level = 10 : i32, message = "qd,kd->qk"}> : () -> ()
    %cst_115 = arith.constant dense<0.000000e+00> : vector<8x8xf32>
    %286 = tpu.matmul %284, %285, %cst_115 {dimension_numbers = #tpu.dot_dimension_numbers<[1], [1], [0], [0], [0, 0, 1, 0], [], []>} : vector<8x8xf32>, vector<8x8xf32>, vector<8x8xf32> -> vector<8x8xf32>
    "tpu.trace_stop"() : () -> ()
    %cst_116 = arith.constant 0.353553385 : f32
    %287 = vector.broadcast %cst_116 : f32 to vector<8x8xf32>
    %288 = arith.mulf %286, %287 : vector<8x8xf32>
    %289 = vector.broadcast %241 : vector<1x8xf32> to vector<8x8xf32>
    %290 = arith.addf %288, %289 : vector<8x8xf32>
    %cst_117 = arith.constant dense<0xFF800000> : vector<8xf32>
    %291 = vector.multi_reduction <maximumf>, %290, %cst_117 [1] : vector<8x8xf32> to vector<8xf32>
    %292 = vector.shape_cast %291 : vector<8xf32> to vector<8x1xf32>
    %293 = vector.broadcast %292 : vector<8x1xf32> to vector<8x8xf32>
    %294 = arith.subf %290, %293 : vector<8x8xf32>
    %295 = math.exp %294 : vector<8x8xf32>
    %cst_118 = arith.constant dense<0.000000e+00> : vector<8xf32>
    %296 = vector.multi_reduction <add>, %295, %cst_118 [1] : vector<8x8xf32> to vector<8xf32>
    %297 = vector.shape_cast %296 : vector<8xf32> to vector<8x1xf32>
    %298 = tpu.reciprocal %297 {approx = true} : vector<8x1xf32> -> vector<8x1xf32>
    %299 = vector.broadcast %298 : vector<8x1xf32> to vector<8x8xf32>
    %300 = arith.mulf %295, %299 : vector<8x8xf32>
    %301 = vector.extract_strided_slice %243 {offsets = [0, 16], sizes = [8, 8], strides = [1, 1]} : vector<8x32xf32> to vector<8x8xf32>
    %cst_119 = arith.constant dense<0.000000e+00> : vector<8x8xf32>
    %302 = tpu.matmul %300, %301, %cst_119 {dimension_numbers = #tpu.dot_dimension_numbers<[1], [0], [0], [1], [0, 0, 1, 1], [], []>} : vector<8x8xf32>, vector<8x8xf32>, vector<8x8xf32> -> vector<8x8xf32>
    %c0_120 = arith.constant 0 : index
    %c16_121 = arith.constant 16 : index
    %303 = vector.load %arg17[%c0_120, %c16_121] : memref<16x32xf32, #tpu.memory_space<vmem>>, vector<8x8xf32>
    tpu.vector_store %arg17[%c0_120, %c16_121], %302 {strides = array<i32>} : memref<16x32xf32, #tpu.memory_space<vmem>>, vector<8x8xf32>,
    %304 = vector.extract_strided_slice %236 {offsets = [0, 24], sizes = [8, 8], strides = [1, 1]} : vector<8x32xf32> to vector<8x8xf32>
    %305 = vector.extract_strided_slice %242 {offsets = [0, 24], sizes = [8, 8], strides = [1, 1]} : vector<8x32xf32> to vector<8x8xf32>
    "tpu.trace_start"() <{level = 10 : i32, message = "qd,kd->qk"}> : () -> ()
    %cst_122 = arith.constant dense<0.000000e+00> : vector<8x8xf32>
    %306 = tpu.matmul %304, %305, %cst_122 {dimension_numbers = #tpu.dot_dimension_numbers<[1], [1], [0], [0], [0, 0, 1, 0], [], []>} : vector<8x8xf32>, vector<8x8xf32>, vector<8x8xf32> -> vector<8x8xf32>
    "tpu.trace_stop"() : () -> ()
    %cst_123 = arith.constant 0.353553385 : f32
    %307 = vector.broadcast %cst_123 : f32 to vector<8x8xf32>
    %308 = arith.mulf %306, %307 : vector<8x8xf32>
    %309 = vector.broadcast %241 : vector<1x8xf32> to vector<8x8xf32>
    %310 = arith.addf %308, %309 : vector<8x8xf32>
    %cst_124 = arith.constant dense<0xFF800000> : vector<8xf32>
    %311 = vector.multi_reduction <maximumf>, %310, %cst_124 [1] : vector<8x8xf32> to vector<8xf32>
    %312 = vector.shape_cast %311 : vector<8xf32> to vector<8x1xf32>
    %313 = vector.broadcast %312 : vector<8x1xf32> to vector<8x8xf32>
    %314 = arith.subf %310, %313 : vector<8x8xf32>
    %315 = math.exp %314 : vector<8x8xf32>
    %cst_125 = arith.constant dense<0.000000e+00> : vector<8xf32>
    %316 = vector.multi_reduction <add>, %315, %cst_125 [1] : vector<8x8xf32> to vector<8xf32>
    %317 = vector.shape_cast %316 : vector<8xf32> to vector<8x1xf32>
    %318 = tpu.reciprocal %317 {approx = true} : vector<8x1xf32> -> vector<8x1xf32>
    %319 = vector.broadcast %318 : vector<8x1xf32> to vector<8x8xf32>
    %320 = arith.mulf %315, %319 : vector<8x8xf32>
    %321 = vector.extract_strided_slice %243 {offsets = [0, 24], sizes = [8, 8], strides = [1, 1]} : vector<8x32xf32> to vector<8x8xf32>
    %cst_126 = arith.constant dense<0.000000e+00> : vector<8x8xf32>
    %322 = tpu.matmul %320, %321, %cst_126 {dimension_numbers = #tpu.dot_dimension_numbers<[1], [0], [0], [1], [0, 0, 1, 1], [], []>} : vector<8x8xf32>, vector<8x8xf32>, vector<8x8xf32> -> vector<8x8xf32>
    %c0_127 = arith.constant 0 : index
    %c24_128 = arith.constant 24 : index
    %323 = vector.load %arg17[%c0_127, %c24_128] : memref<16x32xf32, #tpu.memory_space<vmem>>, vector<8x8xf32>
    tpu.vector_store %arg17[%c0_127, %c24_128], %322 {strides = array<i32>} : memref<16x32xf32, #tpu.memory_space<vmem>>, vector<8x8xf32>,
    %324 = vector.extract_strided_slice %230 {offsets = [8, 0], sizes = [8, 32], strides = [1, 1]} : vector<16x32xf32> to vector<8x32xf32>
    %325 = vector.extract_strided_slice %235 {offsets = [8, 0], sizes = [8, 64], strides = [1, 1]} : vector<16x64xf32> to vector<8x64xf32>
    %c1_129 = arith.constant 1 : index
    %c0_130 = arith.constant 0 : index
    %c0_131 = arith.constant 0 : index
    %326 = vector.load %arg4[%c1_129, %c0_130, %c0_131] : memref<2x1x8xf32, #tpu.memory_space<vmem>>, vector<1x1x8xf32>
    %327 = vector.shape_cast %326 : vector<1x1x8xf32> to vector<1x8xf32>
    %cst_132 = arith.constant -1.000000e+09 : f32
    %328 = vector.broadcast %cst_132 : f32 to vector<1x8xf32>
    %329 = arith.mulf %327, %328 : vector<1x8xf32>
    %330 = vector.extract_strided_slice %325 {offsets = [0, 0], sizes = [8, 32], strides = [1, 1]} : vector<8x64xf32> to vector<8x32xf32>
    %331 = vector.extract_strided_slice %325 {offsets = [0, 32], sizes = [8, 32], strides = [1, 1]} : vector<8x64xf32> to vector<8x32xf32>
    %332 = vector.extract_strided_slice %324 {offsets = [0, 0], sizes = [8, 8], strides = [1, 1]} : vector<8x32xf32> to vector<8x8xf32>
    %333 = vector.extract_strided_slice %330 {offsets = [0, 0], sizes = [8, 8], strides = [1, 1]} : vector<8x32xf32> to vector<8x8xf32>
    "tpu.trace_start"() <{level = 10 : i32, message = "qd,kd->qk"}> : () -> ()
    %cst_133 = arith.constant dense<0.000000e+00> : vector<8x8xf32>
    %334 = tpu.matmul %332, %333, %cst_133 {dimension_numbers = #tpu.dot_dimension_numbers<[1], [1], [0], [0], [0, 0, 1, 0], [], []>} : vector<8x8xf32>, vector<8x8xf32>, vector<8x8xf32> -> vector<8x8xf32>
    "tpu.trace_stop"() : () -> ()
    %cst_134 = arith.constant 0.353553385 : f32
    %335 = vector.broadcast %cst_134 : f32 to vector<8x8xf32>
    %336 = arith.mulf %334, %335 : vector<8x8xf32>
    %337 = vector.broadcast %329 : vector<1x8xf32> to vector<8x8xf32>
    %338 = arith.addf %336, %337 : vector<8x8xf32>
    %cst_135 = arith.constant dense<0xFF800000> : vector<8xf32>
    %339 = vector.multi_reduction <maximumf>, %338, %cst_135 [1] : vector<8x8xf32> to vector<8xf32>
    %340 = vector.shape_cast %339 : vector<8xf32> to vector<8x1xf32>
    %341 = vector.broadcast %340 : vector<8x1xf32> to vector<8x8xf32>
    %342 = arith.subf %338, %341 : vector<8x8xf32>
    %343 = math.exp %342 : vector<8x8xf32>
    %cst_136 = arith.constant dense<0.000000e+00> : vector<8xf32>
    %344 = vector.multi_reduction <add>, %343, %cst_136 [1] : vector<8x8xf32> to vector<8xf32>
    %345 = vector.shape_cast %344 : vector<8xf32> to vector<8x1xf32>
    %346 = tpu.reciprocal %345 {approx = true} : vector<8x1xf32> -> vector<8x1xf32>
    %347 = vector.broadcast %346 : vector<8x1xf32> to vector<8x8xf32>
    %348 = arith.mulf %343, %347 : vector<8x8xf32>
    %349 = vector.extract_strided_slice %331 {offsets = [0, 0], sizes = [8, 8], strides = [1, 1]} : vector<8x32xf32> to vector<8x8xf32>
    %cst_137 = arith.constant dense<0.000000e+00> : vector<8x8xf32>
    %350 = tpu.matmul %348, %349, %cst_137 {dimension_numbers = #tpu.dot_dimension_numbers<[1], [0], [0], [1], [0, 0, 1, 1], [], []>} : vector<8x8xf32>, vector<8x8xf32>, vector<8x8xf32> -> vector<8x8xf32>
    %c8_138 = arith.constant 8 : index
    %c0_139 = arith.constant 0 : index
    %351 = vector.load %arg17[%c8_138, %c0_139] : memref<16x32xf32, #tpu.memory_space<vmem>>, vector<8x8xf32>
    tpu.vector_store %arg17[%c8_138, %c0_139], %350 {strides = array<i32>} : memref<16x32xf32, #tpu.memory_space<vmem>>, vector<8x8xf32>,
    %352 = vector.extract_strided_slice %324 {offsets = [0, 8], sizes = [8, 8], strides = [1, 1]} : vector<8x32xf32> to vector<8x8xf32>
    %353 = vector.extract_strided_slice %330 {offsets = [0, 8], sizes = [8, 8], strides = [1, 1]} : vector<8x32xf32> to vector<8x8xf32>
    "tpu.trace_start"() <{level = 10 : i32, message = "qd,kd->qk"}> : () -> ()
    %cst_140 = arith.constant dense<0.000000e+00> : vector<8x8xf32>
    %354 = tpu.matmul %352, %353, %cst_140 {dimension_numbers = #tpu.dot_dimension_numbers<[1], [1], [0], [0], [0, 0, 1, 0], [], []>} : vector<8x8xf32>, vector<8x8xf32>, vector<8x8xf32> -> vector<8x8xf32>
    "tpu.trace_stop"() : () -> ()
    %cst_141 = arith.constant 0.353553385 : f32
    %355 = vector.broadcast %cst_141 : f32 to vector<8x8xf32>
    %356 = arith.mulf %354, %355 : vector<8x8xf32>
    %357 = vector.broadcast %329 : vector<1x8xf32> to vector<8x8xf32>
    %358 = arith.addf %356, %357 : vector<8x8xf32>
    %cst_142 = arith.constant dense<0xFF800000> : vector<8xf32>
    %359 = vector.multi_reduction <maximumf>, %358, %cst_142 [1] : vector<8x8xf32> to vector<8xf32>
    %360 = vector.shape_cast %359 : vector<8xf32> to vector<8x1xf32>
    %361 = vector.broadcast %360 : vector<8x1xf32> to vector<8x8xf32>
    %362 = arith.subf %358, %361 : vector<8x8xf32>
    %363 = math.exp %362 : vector<8x8xf32>
    %cst_143 = arith.constant dense<0.000000e+00> : vector<8xf32>
    %364 = vector.multi_reduction <add>, %363, %cst_143 [1] : vector<8x8xf32> to vector<8xf32>
    %365 = vector.shape_cast %364 : vector<8xf32> to vector<8x1xf32>
    %366 = tpu.reciprocal %365 {approx = true} : vector<8x1xf32> -> vector<8x1xf32>
    %367 = vector.broadcast %366 : vector<8x1xf32> to vector<8x8xf32>
    %368 = arith.mulf %363, %367 : vector<8x8xf32>
    %369 = vector.extract_strided_slice %331 {offsets = [0, 8], sizes = [8, 8], strides = [1, 1]} : vector<8x32xf32> to vector<8x8xf32>
    %cst_144 = arith.constant dense<0.000000e+00> : vector<8x8xf32>
    %370 = tpu.matmul %368, %369, %cst_144 {dimension_numbers = #tpu.dot_dimension_numbers<[1], [0], [0], [1], [0, 0, 1, 1], [], []>} : vector<8x8xf32>, vector<8x8xf32>, vector<8x8xf32> -> vector<8x8xf32>
    %c8_145 = arith.constant 8 : index
    %c8_146 = arith.constant 8 : index
    %371 = vector.load %arg17[%c8_145, %c8_146] : memref<16x32xf32, #tpu.memory_space<vmem>>, vector<8x8xf32>
    tpu.vector_store %arg17[%c8_145, %c8_146], %370 {strides = array<i32>} : memref<16x32xf32, #tpu.memory_space<vmem>>, vector<8x8xf32>,
    %372 = vector.extract_strided_slice %324 {offsets = [0, 16], sizes = [8, 8], strides = [1, 1]} : vector<8x32xf32> to vector<8x8xf32>
    %373 = vector.extract_strided_slice %330 {offsets = [0, 16], sizes = [8, 8], strides = [1, 1]} : vector<8x32xf32> to vector<8x8xf32>
    "tpu.trace_start"() <{level = 10 : i32, message = "qd,kd->qk"}> : () -> ()
    %cst_147 = arith.constant dense<0.000000e+00> : vector<8x8xf32>
    %374 = tpu.matmul %372, %373, %cst_147 {dimension_numbers = #tpu.dot_dimension_numbers<[1], [1], [0], [0], [0, 0, 1, 0], [], []>} : vector<8x8xf32>, vector<8x8xf32>, vector<8x8xf32> -> vector<8x8xf32>
    "tpu.trace_stop"() : () -> ()
    %cst_148 = arith.constant 0.353553385 : f32
    %375 = vector.broadcast %cst_148 : f32 to vector<8x8xf32>
    %376 = arith.mulf %374, %375 : vector<8x8xf32>
    %377 = vector.broadcast %329 : vector<1x8xf32> to vector<8x8xf32>
    %378 = arith.addf %376, %377 : vector<8x8xf32>
    %cst_149 = arith.constant dense<0xFF800000> : vector<8xf32>
    %379 = vector.multi_reduction <maximumf>, %378, %cst_149 [1] : vector<8x8xf32> to vector<8xf32>
    %380 = vector.shape_cast %379 : vector<8xf32> to vector<8x1xf32>
    %381 = vector.broadcast %380 : vector<8x1xf32> to vector<8x8xf32>
    %382 = arith.subf %378, %381 : vector<8x8xf32>
    %383 = math.exp %382 : vector<8x8xf32>
    %cst_150 = arith.constant dense<0.000000e+00> : vector<8xf32>
    %384 = vector.multi_reduction <add>, %383, %cst_150 [1] : vector<8x8xf32> to vector<8xf32>
    %385 = vector.shape_cast %384 : vector<8xf32> to vector<8x1xf32>
    %386 = tpu.reciprocal %385 {approx = true} : vector<8x1xf32> -> vector<8x1xf32>
    %387 = vector.broadcast %386 : vector<8x1xf32> to vector<8x8xf32>
    %388 = arith.mulf %383, %387 : vector<8x8xf32>
    %389 = vector.extract_strided_slice %331 {offsets = [0, 16], sizes = [8, 8], strides = [1, 1]} : vector<8x32xf32> to vector<8x8xf32>
    %cst_151 = arith.constant dense<0.000000e+00> : vector<8x8xf32>
    %390 = tpu.matmul %388, %389, %cst_151 {dimension_numbers = #tpu.dot_dimension_numbers<[1], [0], [0], [1], [0, 0, 1, 1], [], []>} : vector<8x8xf32>, vector<8x8xf32>, vector<8x8xf32> -> vector<8x8xf32>
    %c8_152 = arith.constant 8 : index
    %c16_153 = arith.constant 16 : index
    %391 = vector.load %arg17[%c8_152, %c16_153] : memref<16x32xf32, #tpu.memory_space<vmem>>, vector<8x8xf32>
    tpu.vector_store %arg17[%c8_152, %c16_153], %390 {strides = array<i32>} : memref<16x32xf32, #tpu.memory_space<vmem>>, vector<8x8xf32>,
    %392 = vector.extract_strided_slice %324 {offsets = [0, 24], sizes = [8, 8], strides = [1, 1]} : vector<8x32xf32> to vector<8x8xf32>
    %393 = vector.extract_strided_slice %330 {offsets = [0, 24], sizes = [8, 8], strides = [1, 1]} : vector<8x32xf32> to vector<8x8xf32>
    "tpu.trace_start"() <{level = 10 : i32, message = "qd,kd->qk"}> : () -> ()
    %cst_154 = arith.constant dense<0.000000e+00> : vector<8x8xf32>
    %394 = tpu.matmul %392, %393, %cst_154 {dimension_numbers = #tpu.dot_dimension_numbers<[1], [1], [0], [0], [0, 0, 1, 0], [], []>} : vector<8x8xf32>, vector<8x8xf32>, vector<8x8xf32> -> vector<8x8xf32>
    "tpu.trace_stop"() : () -> ()
    %cst_155 = arith.constant 0.353553385 : f32
    %395 = vector.broadcast %cst_155 : f32 to vector<8x8xf32>
    %396 = arith.mulf %394, %395 : vector<8x8xf32>
    %397 = vector.broadcast %329 : vector<1x8xf32> to vector<8x8xf32>
    %398 = arith.addf %396, %397 : vector<8x8xf32>
    %cst_156 = arith.constant dense<0xFF800000> : vector<8xf32>
    %399 = vector.multi_reduction <maximumf>, %398, %cst_156 [1] : vector<8x8xf32> to vector<8xf32>
    %400 = vector.shape_cast %399 : vector<8xf32> to vector<8x1xf32>
    %401 = vector.broadcast %400 : vector<8x1xf32> to vector<8x8xf32>
    %402 = arith.subf %398, %401 : vector<8x8xf32>
    %403 = math.exp %402 : vector<8x8xf32>
    %cst_157 = arith.constant dense<0.000000e+00> : vector<8xf32>
    %404 = vector.multi_reduction <add>, %403, %cst_157 [1] : vector<8x8xf32> to vector<8xf32>
    %405 = vector.shape_cast %404 : vector<8xf32> to vector<8x1xf32>
    %406 = tpu.reciprocal %405 {approx = true} : vector<8x1xf32> -> vector<8x1xf32>
    %407 = vector.broadcast %406 : vector<8x1xf32> to vector<8x8xf32>
    %408 = arith.mulf %403, %407 : vector<8x8xf32>
    %409 = vector.extract_strided_slice %331 {offsets = [0, 24], sizes = [8, 8], strides = [1, 1]} : vector<8x32xf32> to vector<8x8xf32>
    %cst_158 = arith.constant dense<0.000000e+00> : vector<8x8xf32>
    %410 = tpu.matmul %408, %409, %cst_158 {dimension_numbers = #tpu.dot_dimension_numbers<[1], [0], [0], [1], [0, 0, 1, 1], [], []>} : vector<8x8xf32>, vector<8x8xf32>, vector<8x8xf32> -> vector<8x8xf32>
    %c8_159 = arith.constant 8 : index
    %c24_160 = arith.constant 24 : index
    %411 = vector.load %arg17[%c8_159, %c24_160] : memref<16x32xf32, #tpu.memory_space<vmem>>, vector<8x8xf32>
    tpu.vector_store %arg17[%c8_159, %c24_160], %410 {strides = array<i32>} : memref<16x32xf32, #tpu.memory_space<vmem>>, vector<8x8xf32>,
    %c0_161 = arith.constant 0 : index
    %c0_162 = arith.constant 0 : index
    %412 = vector.load %arg17[%c0_161, %c0_162] : memref<16x32xf32, #tpu.memory_space<vmem>>, vector<16x32xf32>
    %c0_163 = arith.constant 0 : index
    %c0_164 = arith.constant 0 : index
    %413 = vector.load %arg11[%c0_163, %c0_164] : memref<32x32xf32, #tpu.memory_space<vmem>>, vector<32x32xf32>
    %cst_165 = arith.constant dense<0.000000e+00> : vector<16x32xf32>
    %414 = tpu.matmul %412, %413, %cst_165 {dimension_numbers = #tpu.dot_dimension_numbers<[1], [0], [0], [1], [0, 0, 1, 1], [], []>} : vector<16x32xf32>, vector<32x32xf32>, vector<16x32xf32> -> vector<16x32xf32>
    %415 = vector.broadcast %3 : vector<1x32xf32> to vector<16x32xf32>
    %416 = arith.addf %414, %415 : vector<16x32xf32>
    %417 = arith.addf %226, %416 : vector<16x32xf32>
    %cst_166 = arith.constant dense<0.000000e+00> : vector<16xf32>
    %418 = vector.multi_reduction <add>, %417, %cst_166 [1] : vector<16x32xf32> to vector<16xf32>
    %419 = vector.shape_cast %418 : vector<16xf32> to vector<16x1xf32>
    %cst_167 = arith.constant 3.200000e+01 : f32
    %420 = vector.broadcast %cst_167 : f32 to vector<16x1xf32>
    %421 = arith.divf %419, %420 : vector<16x1xf32>
    %422 = vector.broadcast %421 : vector<16x1xf32> to vector<16x32xf32>
    %423 = arith.subf %417, %422 : vector<16x32xf32>
    %424 = arith.mulf %423, %423 : vector<16x32xf32>
    %cst_168 = arith.constant dense<0.000000e+00> : vector<16xf32>
    %425 = vector.multi_reduction <add>, %424, %cst_168 [1] : vector<16x32xf32> to vector<16xf32>
    %426 = vector.shape_cast %425 : vector<16xf32> to vector<16x1xf32>
    %cst_169 = arith.constant 3.200000e+01 : f32
    %427 = vector.broadcast %cst_169 : f32 to vector<16x1xf32>
    %428 = arith.divf %426, %427 : vector<16x1xf32>
    %429 = vector.broadcast %421 : vector<16x1xf32> to vector<16x32xf32>
    %430 = arith.subf %417, %429 : vector<16x32xf32>
    %cst_170 = arith.constant 9.99999974E-6 : f32
    %431 = vector.broadcast %cst_170 : f32 to vector<16x1xf32>
    %432 = arith.addf %428, %431 : vector<16x1xf32>
    %433 = math.rsqrt %432 : vector<16x1xf32>
    %434 = vector.broadcast %433 : vector<16x1xf32> to vector<16x32xf32>
    %435 = arith.mulf %430, %434 : vector<16x32xf32>
    %436 = vector.broadcast %7 : vector<1x32xf32> to vector<16x32xf32>
    %437 = arith.mulf %435, %436 : vector<16x32xf32>
    %438 = vector.broadcast %8 : vector<1x32xf32> to vector<16x32xf32>
    %439 = arith.addf %437, %438 : vector<16x32xf32>
    %c0_171 = arith.constant 0 : index
    %c0_172 = arith.constant 0 : index
    %440 = vector.load %arg12[%c0_171, %c0_172] : memref<32x64xf32, #tpu.memory_space<vmem>>, vector<32x64xf32>
    %cst_173 = arith.constant dense<0.000000e+00> : vector<16x64xf32>
    %441 = tpu.matmul %439, %440, %cst_173 {dimension_numbers = #tpu.dot_dimension_numbers<[1], [0], [0], [1], [0, 0, 1, 1], [], []>} : vector<16x32xf32>, vector<32x64xf32>, vector<16x64xf32> -> vector<16x64xf32>
    %c0_174 = arith.constant 0 : index
    %c0_175 = arith.constant 0 : index
    %442 = vector.load %arg13[%c0_174, %c0_175] : memref<1x64xf32, #tpu.memory_space<vmem>>, vector<1x64xf32>
    %443 = vector.broadcast %442 : vector<1x64xf32> to vector<16x64xf32>
    %444 = arith.addf %441, %443 : vector<16x64xf32>
    %cst_176 = arith.constant 0.000000e+00 : f32
    %445 = vector.broadcast %cst_176 : f32 to vector<16x64xf32>
    %446 = arith.maximumf %444, %445 : vector<16x64xf32>
    %c0_177 = arith.constant 0 : index
    %c0_178 = arith.constant 0 : index
    %447 = vector.load %arg14[%c0_177, %c0_178] : memref<64x32xf32, #tpu.memory_space<vmem>>, vector<64x32xf32>
    %cst_179 = arith.constant dense<0.000000e+00> : vector<16x32xf32>
    %448 = tpu.matmul %446, %447, %cst_179 {dimension_numbers = #tpu.dot_dimension_numbers<[1], [0], [0], [1], [0, 0, 1, 1], [], []>} : vector<16x64xf32>, vector<64x32xf32>, vector<16x32xf32> -> vector<16x32xf32>
    %449 = vector.broadcast %4 : vector<1x32xf32> to vector<16x32xf32>
    %450 = arith.addf %448, %449 : vector<16x32xf32>
    %451 = arith.addf %439, %450 : vector<16x32xf32>
    %cst_180 = arith.constant dense<0.000000e+00> : vector<16xf32>
    %452 = vector.multi_reduction <add>, %451, %cst_180 [1] : vector<16x32xf32> to vector<16xf32>
    %453 = vector.shape_cast %452 : vector<16xf32> to vector<16x1xf32>
    %cst_181 = arith.constant 3.200000e+01 : f32
    %454 = vector.broadcast %cst_181 : f32 to vector<16x1xf32>
    %455 = arith.divf %453, %454 : vector<16x1xf32>
    %456 = vector.broadcast %455 : vector<16x1xf32> to vector<16x32xf32>
    %457 = arith.subf %451, %456 : vector<16x32xf32>
    %458 = arith.mulf %457, %457 : vector<16x32xf32>
    %cst_182 = arith.constant dense<0.000000e+00> : vector<16xf32>
    %459 = vector.multi_reduction <add>, %458, %cst_182 [1] : vector<16x32xf32> to vector<16xf32>
    %460 = vector.shape_cast %459 : vector<16xf32> to vector<16x1xf32>
    %cst_183 = arith.constant 3.200000e+01 : f32
    %461 = vector.broadcast %cst_183 : f32 to vector<16x1xf32>
    %462 = arith.divf %460, %461 : vector<16x1xf32>
    %463 = vector.broadcast %455 : vector<16x1xf32> to vector<16x32xf32>
    %464 = arith.subf %451, %463 : vector<16x32xf32>
    %cst_184 = arith.constant 9.99999974E-6 : f32
    %465 = vector.broadcast %cst_184 : f32 to vector<16x1xf32>
    %466 = arith.addf %462, %465 : vector<16x1xf32>
    %467 = math.rsqrt %466 : vector<16x1xf32>
    %468 = vector.broadcast %467 : vector<16x1xf32> to vector<16x32xf32>
    %469 = arith.mulf %464, %468 : vector<16x32xf32>
    %470 = vector.broadcast %9 : vector<1x32xf32> to vector<16x32xf32>
    %471 = arith.mulf %469, %470 : vector<16x32xf32>
    %472 = vector.broadcast %10 : vector<1x32xf32> to vector<16x32xf32>
    %473 = arith.addf %471, %472 : vector<16x32xf32>
    %474 = vector.extract_strided_slice %473 {offsets = [0, 0], sizes = [8, 32], strides = [1, 1]} : vector<16x32xf32> to vector<8x32xf32>
    %c0_185 = arith.constant 0 : index
    %c0_186 = arith.constant 0 : index
    %c0_187 = arith.constant 0 : index
    %475 = vector.load %arg16[%c0_185, %c0_186, %c0_187] : memref<2x8x32xf32, #tpu.memory_space<vmem>>, vector<1x8x32xf32>
    %476 = vector.shape_cast %475 : vector<1x8x32xf32> to vector<8x32xf32>
    %477 = vector.shape_cast %474 : vector<8x32xf32> to vector<1x8x32xf32>
    tpu.vector_store %arg16[%c0_185, %c0_186, %c0_187], %477 {strides = array<i32>} : memref<2x8x32xf32, #tpu.memory_space<vmem>>, vector<1x8x32xf32>,
    %478 = vector.extract_strided_slice %473 {offsets = [8, 0], sizes = [8, 32], strides = [1, 1]} : vector<16x32xf32> to vector<8x32xf32>
    %c1_188 = arith.constant 1 : index
    %c0_189 = arith.constant 0 : index
    %c0_190 = arith.constant 0 : index
    %479 = vector.load %arg16[%c1_188, %c0_189, %c0_190] : memref<2x8x32xf32, #tpu.memory_space<vmem>>, vector<1x8x32xf32>
    %480 = vector.shape_cast %479 : vector<1x8x32xf32> to vector<8x32xf32>
    %481 = vector.shape_cast %478 : vector<8x32xf32> to vector<1x8x32xf32>
    tpu.vector_store %arg16[%c1_188, %c0_189, %c0_190], %481 {strides = array<i32>} : memref<2x8x32xf32, #tpu.memory_space<vmem>>, vector<1x8x32xf32>,
    return
  }
}

</mosaic_0001>

<llo_original>
// kernel: custom_decoder_layer.1
$region0: #{custom_decoder_layer.1}
  #allocation0 [shape = 'u32[]', space=smem, size = 0x4, offset = 0x4, fixed_abs, tag = 'smem constant byte address 0x4 - core index']
  #allocation1 [shape = 'u32[72,128]{1,0:T(1,128)}', space=vmem, size = 0x9000, scoped, tag = 'internal scratch']
  #allocation2 [shape = 'f32[16,32]{1,0:T(8,128)}', space=vmem, size = 0x2000, scoped, tag = 'scratch operand']
  %s0 = inlined_call_operand.vmem [shape: f32[2,8,32], index: 0, kind: input, shape index: {}]
  %s1 = inlined_call_operand.vmem [shape: f32[2,8,32], index: 1, kind: input, shape index: {}]
  %s2 = inlined_call_operand.vmem [shape: f32[8,8], index: 2, kind: input, shape index: {}]
  %s3 = inlined_call_operand.vmem [shape: f32[2,1,8], index: 3, kind: input, shape index: {}]
  %s4 = inlined_call_operand.vmem [shape: f32[2,1,8], index: 4, kind: input, shape index: {}]
  %s5 = inlined_call_operand.vmem [shape: f32[32,96], index: 5, kind: input, shape index: {}]
  %s6 = inlined_call_operand.vmem [shape: f32[1,96], index: 6, kind: input, shape index: {}]
  %s7 = inlined_call_operand.vmem [shape: f32[32,32], index: 7, kind: input, shape index: {}]
  %s8 = inlined_call_operand.vmem [shape: f32[32,32], index: 8, kind: input, shape index: {}]
  %s9 = inlined_call_operand.vmem [shape: f32[32,64], index: 9, kind: input, shape index: {}]
  %s10 = inlined_call_operand.vmem [shape: f32[1,64], index: 10, kind: input, shape index: {}]
  %s11 = inlined_call_operand.vmem [shape: f32[32,32], index: 11, kind: input, shape index: {}]
  %s12 = inlined_call_operand.vmem [shape: f32[32,64], index: 12, kind: input, shape index: {}]
  %s13 = inlined_call_operand.vmem [shape: f32[1,64], index: 13, kind: input, shape index: {}]
  %s14 = inlined_call_operand.vmem [shape: f32[64,32], index: 14, kind: input, shape index: {}]
  %s15 = inlined_call_operand.vmem [shape: f32[10,32], index: 15, kind: input, shape index: {}]
  %s16 = inlined_call_operand.vmem [shape: f32[2,8,32], index: 16, kind: output, shape index: {}]
  %s17 = sld [smem:[#allocation0]]
  $region74: #{custom_decoder_layer.1} parent=0
    _
  %s19 = ssub.s32 1, %s17
  %s20 = scalar_select 0, %s19, %s17
  // Predicated region
  $region2: #{custom_decoder_layer.1} parent=0 // pred_check
    _
  $region3: #{custom_decoder_layer.1} parent=0 // pred_check_branch
    %22 = sbr.rel (0) target = $region5
  $region4: #{custom_decoder_layer.1} parent=0 // pred_region
    _
  $region5: #{custom_decoder_layer.1} parent=0 // pred_fallthru
    _
  // Predicated region
  $region6: #{custom_decoder_layer.1} parent=0 // pred_check
    _
  $region7: #{custom_decoder_layer.1} parent=0 // pred_check_branch
    %24 = sbr.rel (0) target = $region9
  $region8: #{custom_decoder_layer.1} parent=0 // pred_region
    _
  $region9: #{custom_decoder_layer.1} parent=0 // pred_fallthru
    _
  // Predicated region
  $region10: #{custom_decoder_layer.1} parent=0 // pred_check
    _
  $region11: #{custom_decoder_layer.1} parent=0 // pred_check_branch
    %26 = sbr.rel (0) target = $region13
  $region12: #{custom_decoder_layer.1} parent=0 // pred_region
    _
  $region13: #{custom_decoder_layer.1} parent=0 // pred_fallthru
    _
  // Predicated region
  $region14: #{custom_decoder_layer.1} parent=0 // pred_check
    _
  $region15: #{custom_decoder_layer.1} parent=0 // pred_check_branch
    %28 = sbr.rel (0) target = $region17
  $region16: #{custom_decoder_layer.1} parent=0 // pred_region
    _
  $region17: #{custom_decoder_layer.1} parent=0 // pred_fallthru
    _
  // Predicated region
  $region18: #{custom_decoder_layer.1} parent=0 // pred_check
    _
  $region19: #{custom_decoder_layer.1} parent=0 // pred_check_branch
    %30 = sbr.rel (0) target = $region21
  $region20: #{custom_decoder_layer.1} parent=0 // pred_region
    _
  $region21: #{custom_decoder_layer.1} parent=0 // pred_fallthru
    _
  // Predicated region
  $region22: #{custom_decoder_layer.1} parent=0 // pred_check
    _
  $region23: #{custom_decoder_layer.1} parent=0 // pred_check_branch
    %32 = sbr.rel (0) target = $region25
  $region24: #{custom_decoder_layer.1} parent=0 // pred_region
    _
  $region25: #{custom_decoder_layer.1} parent=0 // pred_fallthru
    _
  // Predicated region
  $region26: #{custom_decoder_layer.1} parent=0 // pred_check
    _
  $region27: #{custom_decoder_layer.1} parent=0 // pred_check_branch
    %34 = sbr.rel (0) target = $region29
  $region28: #{custom_decoder_layer.1} parent=0 // pred_region
    _
  $region29: #{custom_decoder_layer.1} parent=0 // pred_fallthru
    _
  // Predicated region
  $region30: #{custom_decoder_layer.1} parent=0 // pred_check
    _
  $region31: #{custom_decoder_layer.1} parent=0 // pred_check_branch
    %36 = sbr.rel (0) target = $region33
  $region32: #{custom_decoder_layer.1} parent=0 // pred_region
    _
  $region33: #{custom_decoder_layer.1} parent=0 // pred_fallthru
    _
  // Predicated region
  $region34: #{custom_decoder_layer.1} parent=0 // pred_check
    _
  $region35: #{custom_decoder_layer.1} parent=0 // pred_check_branch
    %38 = sbr.rel (0) target = $region37
  $region36: #{custom_decoder_layer.1} parent=0 // pred_region
    _
  $region37: #{custom_decoder_layer.1} parent=0 // pred_fallthru
    _
  // Predicated region
  $region38: #{custom_decoder_layer.1} parent=0 // pred_check
    _
  $region39: #{custom_decoder_layer.1} parent=0 // pred_check_branch
    %40 = sbr.rel (0) target = $region41
  $region40: #{custom_decoder_layer.1} parent=0 // pred_region
    _
  $region41: #{custom_decoder_layer.1} parent=0 // pred_fallthru
    _
  // Predicated region
  $region42: #{custom_decoder_layer.1} parent=0 // pred_check
    _
  $region43: #{custom_decoder_layer.1} parent=0 // pred_check_branch
    %42 = sbr.rel (0) target = $region45
  $region44: #{custom_decoder_layer.1} parent=0 // pred_region
    _
  $region45: #{custom_decoder_layer.1} parent=0 // pred_fallthru
    _
  // Predicated region
  $region46: #{custom_decoder_layer.1} parent=0 // pred_check
    _
  $region47: #{custom_decoder_layer.1} parent=0 // pred_check_branch
    %44 = sbr.rel (0) target = $region49
  $region48: #{custom_decoder_layer.1} parent=0 // pred_region
    _
  $region49: #{custom_decoder_layer.1} parent=0 // pred_fallthru
    _
  // Predicated region
  $region50: #{custom_decoder_layer.1} parent=0 // pred_check
    _
  $region51: #{custom_decoder_layer.1} parent=0 // pred_check_branch
    %46 = sbr.rel (0) target = $region53
  $region52: #{custom_decoder_layer.1} parent=0 // pred_region
    _
  $region53: #{custom_decoder_layer.1} parent=0 // pred_fallthru
    _
  // Predicated region
  $region54: #{custom_decoder_layer.1} parent=0 // pred_check
    _
  $region55: #{custom_decoder_layer.1} parent=0 // pred_check_branch
    %48 = sbr.rel (0) target = $region57
  $region56: #{custom_decoder_layer.1} parent=0 // pred_region
    _
  $region57: #{custom_decoder_layer.1} parent=0 // pred_fallthru
    _
  // Predicated region
  $region58: #{custom_decoder_layer.1} parent=0 // pred_check
    _
  $region59: #{custom_decoder_layer.1} parent=0 // pred_check_branch
    %50 = sbr.rel (0) target = $region61
  $region60: #{custom_decoder_layer.1} parent=0 // pred_region
    _
  $region61: #{custom_decoder_layer.1} parent=0 // pred_fallthru
    _
  // Predicated region
  $region62: #{custom_decoder_layer.1} parent=0 // pred_check
    _
  $region63: #{custom_decoder_layer.1} parent=0 // pred_check_branch
    %52 = sbr.rel (0) target = $region65
  $region64: #{custom_decoder_layer.1} parent=0 // pred_region
    _
  $region65: #{custom_decoder_layer.1} parent=0 // pred_fallthru
    _
  %v53 = vld [vmem:[%s15] sm:$0xff]
  %v54 = vld [vmem:[%s15 + $0x8] sm:$0x3]
  %v55 = vld [vmem:[%s2] sm:$0xff]
  %v56 = vld [vmem:[%s0] sm:$0xff]
  %s57 = scalar_lea.vmem %s0, 8
  %v58 = vld [vmem:[%s57] sm:$0xff]
  %v59 = vld [vmem:[%s1] sm:$0xff]
  %s60 = scalar_lea.vmem %s1, 8
  %v61 = vld [vmem:[%s60] sm:$0xff]
  %v62 = vld [vmem:[%s5] sm:$0xff]
  %v63 = vld [vmem:[%s5 + $0x8] sm:$0xff]
  %v64 = vld [vmem:[%s5 + $0x10] sm:$0xff]
  %v65 = vld [vmem:[%s5 + $0x18] sm:$0xff]
  %v66 = vld [vmem:[%s6] sm:$0x1]
  %v68 = vperm.slane %v66, 0
  %vm70 = vcmask 261120
  %v72 = vsel %vm70, %v56, 0
  %v75 = vsel %vm70, %v58, 0
  %77 = vmatpush.msra.mxu0 0.0
  %78 = vmatpush.msra.mxu0 0.0
  %79 = vmatpush.msra.mxu0 0.0
  %80 = vmatpush.msra.mxu0 0.0
  %81 = vmatpush.msra.mxu0 0.0
  %82 = vmatpush.msra.mxu0 0.0
  %83 = vmatpush.msra.mxu0 0.0
  %84 = vmatpush.msra.mxu0 0.0
  %85 = vmatpush.msra.mxu0 0.0
  %86 = vmatpush.msra.mxu0 0.0
  %87 = vmatpush.msra.mxu0 0.0
  %88 = vmatpush.msra.mxu0 0.0
  %89 = vmatpush.msra.mxu0 %v65
  %90 = vmatpush.msra.mxu0 %v64
  %91 = vmatpush.msra.mxu0 %v63
  %92 = vmatpush.msra.mxu0 %v62
  %93 = vmatmul.f32.gmra.mxu0 %v72
  %v94 = vpop.f32.mrf.mxu0
  %v95 = vadd.f32 %v68, %v94
  %96 = vmatmul.f32.gmra.mxu0 %v75
  %v97 = vpop.f32.mrf.mxu0
  %v98 = vadd.f32 %v68, %v97
  %99 = vdwg.mxu0
  %v100 = vld [vmem:[%s3] sm:$0x1]
  %v101 = vmul.f32 %v100, -1e+09
  %v103 = vperm.slane %v101, 0
  %v105 = vadd.f32 %v55, %v103
  %107 = vrot.lane.b32.xlu0 %v95, 96
  %v108 = vpop.permute.xlu0 %107
  %vm109 = vcmask 64512
  %v110 = vsel %vm109, %v95, 0
  %v112 = vsel %vm109, %v108, 0
  %114 = vmatpush.xpose.msra.mxu0 0.0
  %115 = vmatpush.xpose.msra.mxu0 0.0
  %116 = vmatpush.xpose.msra.mxu0 0.0
  %117 = vmatpush.xpose.msra.mxu0 0.0
  %118 = vmatpush.xpose.msra.mxu0 0.0
  %119 = vmatpush.xpose.msra.mxu0 0.0
  %120 = vmatpush.xpose.msra.mxu0 0.0
  %121 = vmatpush.xpose.msra.mxu0 0.0
  %122 = vmatpush.xpose.msra.mxu0 0.0
  %123 = vmatpush.xpose.msra.mxu0 0.0
  %124 = vmatpush.xpose.msra.mxu0 0.0
  %125 = vmatpush.xpose.msra.mxu0 0.0
  %126 = vmatpush.xpose.msra.mxu0 0.0
  %127 = vmatpush.xpose.msra.mxu0 0.0
  %128 = vmatpush.xpose.msra.mxu0 0.0
  %129 = vmatpush.xpose.msra.mxu0 %v112
  %130 = vmatmul.f32.gmra.mxu0 %v110
  %v131 = vpop.f32.mrf.mxu0
  %v132 = vadd.f32 0.0, %v131
  %133 = vdwg.mxu0
  %v134 = vmul.f32 %v132, 0.35355338
  %v135 = vadd.f32 %v134, %v105
  %v136 = vsel %vm109, %v135, -inf
  %137 = vmax.xlane.f32.xlu0 %v136
  %v138 = vpop.xlane.xlu0 %137
  %v139 = vsub.f32 %v135, %v138
  %v140 = vmul.f32 %v139, 1.442695
  %v141 = vpow.pop %v140
  %v142 = vsel %vm109, %v141, 0.0
  %143 = vadd.xlane.f32.xlu0 %v142
  %v144 = vpop.xlane.xlu0 %143
  %v145 = vrcp.pop %v144
  %v146 = vmul.f32 %v141, %v145
  %147 = vrot.lane.b32.xlu0 %v95, 64
  %v148 = vpop.permute.xlu0 %147
  %v151 = vsel %vm109, %v146, 0
  %153 = vmatpush.msra.mxu0 0.0
  %154 = vmatpush.msra.mxu0 0.0
  %155 = vmatpush.msra.mxu0 0.0
  %156 = vmatpush.msra.mxu0 0.0
  %157 = vmatpush.msra.mxu0 0.0
  %158 = vmatpush.msra.mxu0 0.0
  %159 = vmatpush.msra.mxu0 0.0
  %160 = vmatpush.msra.mxu0 0.0
  %161 = vmatpush.msra.mxu0 0.0
  %162 = vmatpush.msra.mxu0 0.0
  %163 = vmatpush.msra.mxu0 0.0
  %164 = vmatpush.msra.mxu0 0.0
  %165 = vmatpush.msra.mxu0 0.0
  %166 = vmatpush.msra.mxu0 0.0
  %167 = vmatpush.msra.mxu0 0.0
  %168 = vmatpush.msra.mxu0 %v148
  %169 = vmatmul.f32.gmra.mxu0 %v151
  %v170 = vpop.f32.mrf.mxu0
  %v171 = vadd.f32 0.0, %v170
  %172 = vdwg.mxu0
  %173 = vst.msk [vmem:[#allocation2] sm:$0xff] %vm109, %v171
  %174 = vrot.lane.b32.xlu0 %v95, 120
  %v175 = vpop.permute.xlu0 %174
  %176 = vrot.lane.b32.xlu0 %v95, 88
  %v177 = vpop.permute.xlu0 %176
  %v178 = vsel %vm109, %v175, 0
  %v180 = vsel %vm109, %v177, 0
  %182 = vmatpush.xpose.msra.mxu0 0.0
  %183 = vmatpush.xpose.msra.mxu0 0.0
  %184 = vmatpush.xpose.msra.mxu0 0.0
  %185 = vmatpush.xpose.msra.mxu0 0.0
  %186 = vmatpush.xpose.msra.mxu0 0.0
  %187 = vmatpush.xpose.msra.mxu0 0.0
  %188 = vmatpush.xpose.msra.mxu0 0.0
  %189 = vmatpush.xpose.msra.mxu0 0.0
  %190 = vmatpush.xpose.msra.mxu0 0.0
  %191 = vmatpush.xpose.msra.mxu0 0.0
  %192 = vmatpush.xpose.msra.mxu0 0.0
  %193 = vmatpush.xpose.msra.mxu0 0.0
  %194 = vmatpush.xpose.msra.mxu0 0.0
  %195 = vmatpush.xpose.msra.mxu0 0.0
  %196 = vmatpush.xpose.msra.mxu0 0.0
  %197 = vmatpush.xpose.msra.mxu0 %v180
  %198 = vmatmul.f32.gmra.mxu0 %v178
  %v199 = vpop.f32.mrf.mxu0
  %v200 = vadd.f32 0.0, %v199
  %201 = vdwg.mxu0
  %v202 = vmul.f32 %v200, 0.35355338
  %v203 = vadd.f32 %v202, %v105
  %v204 = vsel %vm109, %v203, -inf
  %205 = vmax.xlane.f32.xlu0 %v204
  %v206 = vpop.xlane.xlu0 %205
  %v207 = vsub.f32 %v203, %v206
  %v208 = vmul.f32 %v207, 1.442695
  %v209 = vpow.pop %v208
  %v210 = vsel %vm109, %v209, 0.0
  %211 = vadd.xlane.f32.xlu0 %v210
  %v212 = vpop.xlane.xlu0 %211
  %v213 = vrcp.pop %v212
  %v214 = vmul.f32 %v209, %v213
  %215 = vrot.lane.b32.xlu0 %v95, 56
  %v216 = vpop.permute.xlu0 %215
  %v219 = vsel %vm109, %v214, 0
  %221 = vmatpush.msra.mxu0 0.0
  %222 = vmatpush.msra.mxu0 0.0
  %223 = vmatpush.msra.mxu0 0.0
  %224 = vmatpush.msra.mxu0 0.0
  %225 = vmatpush.msra.mxu0 0.0
  %226 = vmatpush.msra.mxu0 0.0
  %227 = vmatpush.msra.mxu0 0.0
  %228 = vmatpush.msra.mxu0 0.0
  %229 = vmatpush.msra.mxu0 0.0
  %230 = vmatpush.msra.mxu0 0.0
  %231 = vmatpush.msra.mxu0 0.0
  %232 = vmatpush.msra.mxu0 0.0
  %233 = vmatpush.msra.mxu0 0.0
  %234 = vmatpush.msra.mxu0 0.0
  %235 = vmatpush.msra.mxu0 0.0
  %236 = vmatpush.msra.mxu0 %v216
  %237 = vmatmul.f32.gmra.mxu0 %v219
  %v238 = vpop.f32.mrf.mxu0
  %v239 = vadd.f32 0.0, %v238
  %240 = vdwg.mxu0
  %242 = vrot.lane.b32.xlu0 %v239, 8
  %v243 = vpop.permute.xlu0 %242
  %vm245 = vcmask 130112
  %246 = vst.msk [vmem:[#allocation2] sm:$0xff] %vm245, %v243
  %247 = vrot.lane.b32.xlu0 %v95, 112
  %v248 = vpop.permute.xlu0 %247
  %249 = vrot.lane.b32.xlu0 %v95, 80
  %v250 = vpop.permute.xlu0 %249
  %v251 = vsel %vm109, %v248, 0
  %v253 = vsel %vm109, %v250, 0
  %255 = vmatpush.xpose.msra.mxu0 0.0
  %256 = vmatpush.xpose.msra.mxu0 0.0
  %257 = vmatpush.xpose.msra.mxu0 0.0
  %258 = vmatpush.xpose.msra.mxu0 0.0
  %259 = vmatpush.xpose.msra.mxu0 0.0
  %260 = vmatpush.xpose.msra.mxu0 0.0
  %261 = vmatpush.xpose.msra.mxu0 0.0
  %262 = vmatpush.xpose.msra.mxu0 0.0
  %263 = vmatpush.xpose.msra.mxu0 0.0
  %264 = vmatpush.xpose.msra.mxu0 0.0
  %265 = vmatpush.xpose.msra.mxu0 0.0
  %266 = vmatpush.xpose.msra.mxu0 0.0
  %267 = vmatpush.xpose.msra.mxu0 0.0
  %268 = vmatpush.xpose.msra.mxu0 0.0
  %269 = vmatpush.xpose.msra.mxu0 0.0
  %270 = vmatpush.xpose.msra.mxu0 %v253
  %271 = vmatmul.f32.gmra.mxu0 %v251
  %v272 = vpop.f32.mrf.mxu0
  %v273 = vadd.f32 0.0, %v272
  %274 = vdwg.mxu0
  %v275 = vmul.f32 %v273, 0.35355338
  %v276 = vadd.f32 %v275, %v105
  %v277 = vsel %vm109, %v276, -inf
  %278 = vmax.xlane.f32.xlu0 %v277
  %v279 = vpop.xlane.xlu0 %278
  %v280 = vsub.f32 %v276, %v279
  %v281 = vmul.f32 %v280, 1.442695
  %v282 = vpow.pop %v281
  %v283 = vsel %vm109, %v282, 0.0
  %284 = vadd.xlane.f32.xlu0 %v283
  %v285 = vpop.xlane.xlu0 %284
  %v286 = vrcp.pop %v285
  %v287 = vmul.f32 %v282, %v286
  %288 = vrot.lane.b32.xlu0 %v95, 48
  %v289 = vpop.permute.xlu0 %288
  %v292 = vsel %vm109, %v287, 0
  %294 = vmatpush.msra.mxu0 0.0
  %295 = vmatpush.msra.mxu0 0.0
  %296 = vmatpush.msra.mxu0 0.0
  %297 = vmatpush.msra.mxu0 0.0
  %298 = vmatpush.msra.mxu0 0.0
  %299 = vmatpush.msra.mxu0 0.0
  %300 = vmatpush.msra.mxu0 0.0
  %301 = vmatpush.msra.mxu0 0.0
  %302 = vmatpush.msra.mxu0 0.0
  %303 = vmatpush.msra.mxu0 0.0
  %304 = vmatpush.msra.mxu0 0.0
  %305 = vmatpush.msra.mxu0 0.0
  %306 = vmatpush.msra.mxu0 0.0
  %307 = vmatpush.msra.mxu0 0.0
  %308 = vmatpush.msra.mxu0 0.0
  %309 = vmatpush.msra.mxu0 %v289
  %310 = vmatmul.f32.gmra.mxu0 %v292
  %v311 = vpop.f32.mrf.mxu0
  %v312 = vadd.f32 0.0, %v311
  %313 = vdwg.mxu0
  %315 = vrot.lane.b32.xlu0 %v312, 16
  %v316 = vpop.permute.xlu0 %315
  %vm318 = vcmask 195712
  %319 = vst.msk [vmem:[#allocation2] sm:$0xff] %vm318, %v316
  %320 = vrot.lane.b32.xlu0 %v95, 104
  %v321 = vpop.permute.xlu0 %320
  %322 = vrot.lane.b32.xlu0 %v95, 72
  %v323 = vpop.permute.xlu0 %322
  %v324 = vsel %vm109, %v321, 0
  %v326 = vsel %vm109, %v323, 0
  %328 = vmatpush.xpose.msra.mxu0 0.0
  %329 = vmatpush.xpose.msra.mxu0 0.0
  %330 = vmatpush.xpose.msra.mxu0 0.0
  %331 = vmatpush.xpose.msra.mxu0 0.0
  %332 = vmatpush.xpose.msra.mxu0 0.0
  %333 = vmatpush.xpose.msra.mxu0 0.0
  %334 = vmatpush.xpose.msra.mxu0 0.0
  %335 = vmatpush.xpose.msra.mxu0 0.0
  %336 = vmatpush.xpose.msra.mxu0 0.0
  %337 = vmatpush.xpose.msra.mxu0 0.0
  %338 = vmatpush.xpose.msra.mxu0 0.0
  %339 = vmatpush.xpose.msra.mxu0 0.0
  %340 = vmatpush.xpose.msra.mxu0 0.0
  %341 = vmatpush.xpose.msra.mxu0 0.0
  %342 = vmatpush.xpose.msra.mxu0 0.0
  %343 = vmatpush.xpose.msra.mxu0 %v326
  %344 = vmatmul.f32.gmra.mxu0 %v324
  %v345 = vpop.f32.mrf.mxu0
  %v346 = vadd.f32 0.0, %v345
  %347 = vdwg.mxu0
  %v348 = vmul.f32 %v346, 0.35355338
  %v349 = vadd.f32 %v348, %v105
  %v350 = vsel %vm109, %v349, -inf
  %351 = vmax.xlane.f32.xlu0 %v350
  %v352 = vpop.xlane.xlu0 %351
  %v353 = vsub.f32 %v349, %v352
  %v354 = vmul.f32 %v353, 1.442695
  %v355 = vpow.pop %v354
  %v356 = vsel %vm109, %v355, 0.0
  %357 = vadd.xlane.f32.xlu0 %v356
  %v358 = vpop.xlane.xlu0 %357
  %v359 = vrcp.pop %v358
  %v360 = vmul.f32 %v355, %v359
  %361 = vrot.lane.b32.xlu0 %v95, 40
  %v362 = vpop.permute.xlu0 %361
  %v365 = vsel %vm109, %v360, 0
  %367 = vmatpush.msra.mxu0 0.0
  %368 = vmatpush.msra.mxu0 0.0
  %369 = vmatpush.msra.mxu0 0.0
  %370 = vmatpush.msra.mxu0 0.0
  %371 = vmatpush.msra.mxu0 0.0
  %372 = vmatpush.msra.mxu0 0.0
  %373 = vmatpush.msra.mxu0 0.0
  %374 = vmatpush.msra.mxu0 0.0
  %375 = vmatpush.msra.mxu0 0.0
  %376 = vmatpush.msra.mxu0 0.0
  %377 = vmatpush.msra.mxu0 0.0
  %378 = vmatpush.msra.mxu0 0.0
  %379 = vmatpush.msra.mxu0 0.0
  %380 = vmatpush.msra.mxu0 0.0
  %381 = vmatpush.msra.mxu0 0.0
  %382 = vmatpush.msra.mxu0 %v362
  %383 = vmatmul.f32.gmra.mxu0 %v365
  %v384 = vpop.f32.mrf.mxu0
  %v385 = vadd.f32 0.0, %v384
  %386 = vdwg.mxu0
  %388 = vrot.lane.b32.xlu0 %v385, 24
  %v389 = vpop.permute.xlu0 %388
  %vm391 = vcmask 261312
  %392 = vst.msk [vmem:[#allocation2] sm:$0xff] %vm391, %v389
  %s393 = scalar_lea.vmem %s3, 1
  %v394 = vld [vmem:[%s393] sm:$0x1]
  %v395 = vmul.f32 %v394, -1e+09
  %v397 = vperm.slane %v395, 0
  %v399 = vadd.f32 %v55, %v397
  %401 = vrot.lane.b32.xlu0 %v98, 96
  %v402 = vpop.permute.xlu0 %401
  %v403 = vsel %vm109, %v98, 0
  %v405 = vsel %vm109, %v402, 0
  %407 = vmatpush.xpose.msra.mxu0 0.0
  %408 = vmatpush.xpose.msra.mxu0 0.0
  %409 = vmatpush.xpose.msra.mxu0 0.0
  %410 = vmatpush.xpose.msra.mxu0 0.0
  %411 = vmatpush.xpose.msra.mxu0 0.0
  %412 = vmatpush.xpose.msra.mxu0 0.0
  %413 = vmatpush.xpose.msra.mxu0 0.0
  %414 = vmatpush.xpose.msra.mxu0 0.0
  %415 = vmatpush.xpose.msra.mxu0 0.0
  %416 = vmatpush.xpose.msra.mxu0 0.0
  %417 = vmatpush.xpose.msra.mxu0 0.0
  %418 = vmatpush.xpose.msra.mxu0 0.0
  %419 = vmatpush.xpose.msra.mxu0 0.0
  %420 = vmatpush.xpose.msra.mxu0 0.0
  %421 = vmatpush.xpose.msra.mxu0 0.0
  %422 = vmatpush.xpose.msra.mxu0 %v405
  %423 = vmatmul.f32.gmra.mxu0 %v403
  %v424 = vpop.f32.mrf.mxu0
  %v425 = vadd.f32 0.0, %v424
  %426 = vdwg.mxu0
  %v427 = vmul.f32 %v425, 0.35355338
  %v428 = vadd.f32 %v427, %v399
  %v429 = vsel %vm109, %v428, -inf
  %430 = vmax.xlane.f32.xlu0 %v429
  %v431 = vpop.xlane.xlu0 %430
  %v432 = vsub.f32 %v428, %v431
  %v433 = vmul.f32 %v432, 1.442695
  %v434 = vpow.pop %v433
  %v435 = vsel %vm109, %v434, 0.0
  %436 = vadd.xlane.f32.xlu0 %v435
  %v437 = vpop.xlane.xlu0 %436
  %v438 = vrcp.pop %v437
  %v439 = vmul.f32 %v434, %v438
  %440 = vrot.lane.b32.xlu0 %v98, 64
  %v441 = vpop.permute.xlu0 %440
  %v444 = vsel %vm109, %v439, 0
  %446 = vmatpush.msra.mxu0 0.0
  %447 = vmatpush.msra.mxu0 0.0
  %448 = vmatpush.msra.mxu0 0.0
  %449 = vmatpush.msra.mxu0 0.0
  %450 = vmatpush.msra.mxu0 0.0
  %451 = vmatpush.msra.mxu0 0.0
  %452 = vmatpush.msra.mxu0 0.0
  %453 = vmatpush.msra.mxu0 0.0
  %454 = vmatpush.msra.mxu0 0.0
  %455 = vmatpush.msra.mxu0 0.0
  %456 = vmatpush.msra.mxu0 0.0
  %457 = vmatpush.msra.mxu0 0.0
  %458 = vmatpush.msra.mxu0 0.0
  %459 = vmatpush.msra.mxu0 0.0
  %460 = vmatpush.msra.mxu0 0.0
  %461 = vmatpush.msra.mxu0 %v441
  %462 = vmatmul.f32.gmra.mxu0 %v444
  %v463 = vpop.f32.mrf.mxu0
  %v464 = vadd.f32 0.0, %v463
  %465 = vdwg.mxu0
  %466 = vst.msk [vmem:[#allocation2 + $0x8] sm:$0xff] %vm109, %v464
  %467 = vrot.lane.b32.xlu0 %v98, 120
  %v468 = vpop.permute.xlu0 %467
  %469 = vrot.lane.b32.xlu0 %v98, 88
  %v470 = vpop.permute.xlu0 %469
  %v471 = vsel %vm109, %v468, 0
  %v473 = vsel %vm109, %v470, 0
  %475 = vmatpush.xpose.msra.mxu0 0.0
  %476 = vmatpush.xpose.msra.mxu0 0.0
  %477 = vmatpush.xpose.msra.mxu0 0.0
  %478 = vmatpush.xpose.msra.mxu0 0.0
  %479 = vmatpush.xpose.msra.mxu0 0.0
  %480 = vmatpush.xpose.msra.mxu0 0.0
  %481 = vmatpush.xpose.msra.mxu0 0.0
  %482 = vmatpush.xpose.msra.mxu0 0.0
  %483 = vmatpush.xpose.msra.mxu0 0.0
  %484 = vmatpush.xpose.msra.mxu0 0.0
  %485 = vmatpush.xpose.msra.mxu0 0.0
  %486 = vmatpush.xpose.msra.mxu0 0.0
  %487 = vmatpush.xpose.msra.mxu0 0.0
  %488 = vmatpush.xpose.msra.mxu0 0.0
  %489 = vmatpush.xpose.msra.mxu0 0.0
  %490 = vmatpush.xpose.msra.mxu0 %v473
  %491 = vmatmul.f32.gmra.mxu0 %v471
  %v492 = vpop.f32.mrf.mxu0
  %v493 = vadd.f32 0.0, %v492
  %494 = vdwg.mxu0
  %v495 = vmul.f32 %v493, 0.35355338
  %v496 = vadd.f32 %v495, %v399
  %v497 = vsel %vm109, %v496, -inf
  %498 = vmax.xlane.f32.xlu0 %v497
  %v499 = vpop.xlane.xlu0 %498
  %v500 = vsub.f32 %v496, %v499
  %v501 = vmul.f32 %v500, 1.442695
  %v502 = vpow.pop %v501
  %v503 = vsel %vm109, %v502, 0.0
  %504 = vadd.xlane.f32.xlu0 %v503
  %v505 = vpop.xlane.xlu0 %504
  %v506 = vrcp.pop %v505
  %v507 = vmul.f32 %v502, %v506
  %508 = vrot.lane.b32.xlu0 %v98, 56
  %v509 = vpop.permute.xlu0 %508
  %v512 = vsel %vm109, %v507, 0
  %514 = vmatpush.msra.mxu0 0.0
  %515 = vmatpush.msra.mxu0 0.0
  %516 = vmatpush.msra.mxu0 0.0
  %517 = vmatpush.msra.mxu0 0.0
  %518 = vmatpush.msra.mxu0 0.0
  %519 = vmatpush.msra.mxu0 0.0
  %520 = vmatpush.msra.mxu0 0.0
  %521 = vmatpush.msra.mxu0 0.0
  %522 = vmatpush.msra.mxu0 0.0
  %523 = vmatpush.msra.mxu0 0.0
  %524 = vmatpush.msra.mxu0 0.0
  %525 = vmatpush.msra.mxu0 0.0
  %526 = vmatpush.msra.mxu0 0.0
  %527 = vmatpush.msra.mxu0 0.0
  %528 = vmatpush.msra.mxu0 0.0
  %529 = vmatpush.msra.mxu0 %v509
  %530 = vmatmul.f32.gmra.mxu0 %v512
  %v531 = vpop.f32.mrf.mxu0
  %v532 = vadd.f32 0.0, %v531
  %533 = vdwg.mxu0
  %535 = vrot.lane.b32.xlu0 %v532, 8
  %v536 = vpop.permute.xlu0 %535
  %538 = vst.msk [vmem:[#allocation2 + $0x8] sm:$0xff] %vm245, %v536
  %539 = vrot.lane.b32.xlu0 %v98, 112
  %v540 = vpop.permute.xlu0 %539
  %541 = vrot.lane.b32.xlu0 %v98, 80
  %v542 = vpop.permute.xlu0 %541
  %v543 = vsel %vm109, %v540, 0
  %v545 = vsel %vm109, %v542, 0
  %547 = vmatpush.xpose.msra.mxu0 0.0
  %548 = vmatpush.xpose.msra.mxu0 0.0
  %549 = vmatpush.xpose.msra.mxu0 0.0
  %550 = vmatpush.xpose.msra.mxu0 0.0
  %551 = vmatpush.xpose.msra.mxu0 0.0
  %552 = vmatpush.xpose.msra.mxu0 0.0
  %553 = vmatpush.xpose.msra.mxu0 0.0
  %554 = vmatpush.xpose.msra.mxu0 0.0
  %555 = vmatpush.xpose.msra.mxu0 0.0
  %556 = vmatpush.xpose.msra.mxu0 0.0
  %557 = vmatpush.xpose.msra.mxu0 0.0
  %558 = vmatpush.xpose.msra.mxu0 0.0
  %559 = vmatpush.xpose.msra.mxu0 0.0
  %560 = vmatpush.xpose.msra.mxu0 0.0
  %561 = vmatpush.xpose.msra.mxu0 0.0
  %562 = vmatpush.xpose.msra.mxu0 %v545
  %563 = vmatmul.f32.gmra.mxu0 %v543
  %v564 = vpop.f32.mrf.mxu0
  %v565 = vadd.f32 0.0, %v564
  %566 = vdwg.mxu0
  %v567 = vmul.f32 %v565, 0.35355338
  %v568 = vadd.f32 %v567, %v399
  %v569 = vsel %vm109, %v568, -inf
  %570 = vmax.xlane.f32.xlu0 %v569
  %v571 = vpop.xlane.xlu0 %570
  %v572 = vsub.f32 %v568, %v571
  %v573 = vmul.f32 %v572, 1.442695
  %v574 = vpow.pop %v573
  %v575 = vsel %vm109, %v574, 0.0
  %576 = vadd.xlane.f32.xlu0 %v575
  %v577 = vpop.xlane.xlu0 %576
  %v578 = vrcp.pop %v577
  %v579 = vmul.f32 %v574, %v578
  %580 = vrot.lane.b32.xlu0 %v98, 48
  %v581 = vpop.permute.xlu0 %580
  %v584 = vsel %vm109, %v579, 0
  %586 = vmatpush.msra.mxu0 0.0
  %587 = vmatpush.msra.mxu0 0.0
  %588 = vmatpush.msra.mxu0 0.0
  %589 = vmatpush.msra.mxu0 0.0
  %590 = vmatpush.msra.mxu0 0.0
  %591 = vmatpush.msra.mxu0 0.0
  %592 = vmatpush.msra.mxu0 0.0
  %593 = vmatpush.msra.mxu0 0.0
  %594 = vmatpush.msra.mxu0 0.0
  %595 = vmatpush.msra.mxu0 0.0
  %596 = vmatpush.msra.mxu0 0.0
  %597 = vmatpush.msra.mxu0 0.0
  %598 = vmatpush.msra.mxu0 0.0
  %599 = vmatpush.msra.mxu0 0.0
  %600 = vmatpush.msra.mxu0 0.0
  %601 = vmatpush.msra.mxu0 %v581
  %602 = vmatmul.f32.gmra.mxu0 %v584
  %v603 = vpop.f32.mrf.mxu0
  %v604 = vadd.f32 0.0, %v603
  %605 = vdwg.mxu0
  %607 = vrot.lane.b32.xlu0 %v604, 16
  %v608 = vpop.permute.xlu0 %607
  %610 = vst.msk [vmem:[#allocation2 + $0x8] sm:$0xff] %vm318, %v608
  %611 = vrot.lane.b32.xlu0 %v98, 104
  %v612 = vpop.permute.xlu0 %611
  %613 = vrot.lane.b32.xlu0 %v98, 72
  %v614 = vpop.permute.xlu0 %613
  %v615 = vsel %vm109, %v612, 0
  %v617 = vsel %vm109, %v614, 0
  %619 = vmatpush.xpose.msra.mxu0 0.0
  %620 = vmatpush.xpose.msra.mxu0 0.0
  %621 = vmatpush.xpose.msra.mxu0 0.0
  %622 = vmatpush.xpose.msra.mxu0 0.0
  %623 = vmatpush.xpose.msra.mxu0 0.0
  %624 = vmatpush.xpose.msra.mxu0 0.0
  %625 = vmatpush.xpose.msra.mxu0 0.0
  %626 = vmatpush.xpose.msra.mxu0 0.0
  %627 = vmatpush.xpose.msra.mxu0 0.0
  %628 = vmatpush.xpose.msra.mxu0 0.0
  %629 = vmatpush.xpose.msra.mxu0 0.0
  %630 = vmatpush.xpose.msra.mxu0 0.0
  %631 = vmatpush.xpose.msra.mxu0 0.0
  %632 = vmatpush.xpose.msra.mxu0 0.0
  %633 = vmatpush.xpose.msra.mxu0 0.0
  %634 = vmatpush.xpose.msra.mxu0 %v617
  %635 = vmatmul.f32.gmra.mxu0 %v615
  %v636 = vpop.f32.mrf.mxu0
  %v637 = vadd.f32 0.0, %v636
  %638 = vdwg.mxu0
  %v639 = vmul.f32 %v637, 0.35355338
  %v640 = vadd.f32 %v639, %v399
  %v641 = vsel %vm109, %v640, -inf
  %642 = vmax.xlane.f32.xlu0 %v641
  %v643 = vpop.xlane.xlu0 %642
  %v644 = vsub.f32 %v640, %v643
  %v645 = vmul.f32 %v644, 1.442695
  %v646 = vpow.pop %v645
  %v647 = vsel %vm109, %v646, 0.0
  %648 = vadd.xlane.f32.xlu0 %v647
  %v649 = vpop.xlane.xlu0 %648
  %v650 = vrcp.pop %v649
  %v651 = vmul.f32 %v646, %v650
  %652 = vrot.lane.b32.xlu0 %v98, 40
  %v653 = vpop.permute.xlu0 %652
  %v656 = vsel %vm109, %v651, 0
  %658 = vmatpush.msra.mxu0 0.0
  %659 = vmatpush.msra.mxu0 0.0
  %660 = vmatpush.msra.mxu0 0.0
  %661 = vmatpush.msra.mxu0 0.0
  %662 = vmatpush.msra.mxu0 0.0
  %663 = vmatpush.msra.mxu0 0.0
  %664 = vmatpush.msra.mxu0 0.0
  %665 = vmatpush.msra.mxu0 0.0
  %666 = vmatpush.msra.mxu0 0.0
  %667 = vmatpush.msra.mxu0 0.0
  %668 = vmatpush.msra.mxu0 0.0
  %669 = vmatpush.msra.mxu0 0.0
  %670 = vmatpush.msra.mxu0 0.0
  %671 = vmatpush.msra.mxu0 0.0
  %672 = vmatpush.msra.mxu0 0.0
  %673 = vmatpush.msra.mxu0 %v653
  %674 = vmatmul.f32.gmra.mxu0 %v656
  %v675 = vpop.f32.mrf.mxu0
  %v676 = vadd.f32 0.0, %v675
  %677 = vdwg.mxu0
  %679 = vrot.lane.b32.xlu0 %v676, 24
  %v680 = vpop.permute.xlu0 %679
  %682 = vst.msk [vmem:[#allocation2 + $0x8] sm:$0xff] %vm391, %v680
  %v683 = vld [vmem:[#allocation2] sm:$0xff]
  %v684 = vld [vmem:[#allocation2 + $0x8] sm:$0xff]
  %v685 = vld [vmem:[%s7] sm:$0xff]
  %v686 = vld [vmem:[%s7 + $0x8] sm:$0xff]
  %v687 = vld [vmem:[%s7 + $0x10] sm:$0xff]
  %v688 = vld [vmem:[%s7 + $0x18] sm:$0xff]
  %v689 = vperm.slane %v53, 1
  %v691 = vsel %vm70, %v683, 0
  %v694 = vsel %vm70, %v684, 0
  %696 = vmatpush.msra.mxu0 0.0
  %697 = vmatpush.msra.mxu0 0.0
  %698 = vmatpush.msra.mxu0 0.0
  %699 = vmatpush.msra.mxu0 0.0
  %700 = vmatpush.msra.mxu0 0.0
  %701 = vmatpush.msra.mxu0 0.0
  %702 = vmatpush.msra.mxu0 0.0
  %703 = vmatpush.msra.mxu0 0.0
  %704 = vmatpush.msra.mxu0 0.0
  %705 = vmatpush.msra.mxu0 0.0
  %706 = vmatpush.msra.mxu0 0.0
  %707 = vmatpush.msra.mxu0 0.0
  %708 = vmatpush.msra.mxu0 %v688
  %709 = vmatpush.msra.mxu0 %v687
  %710 = vmatpush.msra.mxu0 %v686
  %711 = vmatpush.msra.mxu0 %v685
  %712 = vmatmul.f32.gmra.mxu0 %v691
  %v713 = vpop.f32.mrf.mxu0
  %v714 = vadd.f32 %v689, %v713
  %715 = vmatmul.f32.gmra.mxu0 %v694
  %v716 = vpop.f32.mrf.mxu0
  %v717 = vadd.f32 %v689, %v716
  %718 = vdwg.mxu0
  %v719 = vadd.f32 %v56, %v714
  %v720 = vadd.f32 %v58, %v717
  %v721 = vsel %vm70, %v719, 0.0
  %722 = vadd.xlane.f32.xlu0 %v721
  %v723 = vpop.xlane.xlu0 %722
  %v724 = vsel %vm70, %v720, 0.0
  %725 = vadd.xlane.f32.xlu0 %v724
  %v726 = vpop.xlane.xlu0 %725
  %v727 = vrcp.pop 32.0
  %v728 = vmul.f32 32.0, %v727
  %v729 = vsub.f32 1.0, %v728
  %v730 = vmul.f32 %v727, %v729
  %v731 = vadd.f32 %v727, %v730
  %vm732 = vweird.f32 %v727
  %v733 = vsel %vm732, %v727, %v731
  %v734 = vmul.f32 %v723, %v733
  %v735 = vmul.f32 %v726, %v733
  %v736 = vsub.f32 %v719, %v734
  %v737 = vsub.f32 %v720, %v735
  %v738 = vmul.f32 %v736, %v736
  %v739 = vmul.f32 %v737, %v737
  %v740 = vsel %vm70, %v738, 0.0
  %741 = vadd.xlane.f32.xlu0 %v740
  %v742 = vpop.xlane.xlu0 %741
  %v743 = vsel %vm70, %v739, 0.0
  %744 = vadd.xlane.f32.xlu0 %v743
  %v745 = vpop.xlane.xlu0 %744
  %v746 = vmul.f32 %v742, %v733
  %v747 = vmul.f32 %v745, %v733
  %v748 = vadd.f32 %v746, 1e-05
  %v749 = vadd.f32 %v747, 1e-05
  %v750 = vrsqrt.pop %v748
  %v751 = vmul.f32 %v750, %v748
  %v752 = vmul.f32 %v751, %v750
  %v753 = vmul.f32 0.5, %v752
  %v754 = vsub.f32 1.5, %v753
  %v755 = vmul.f32 %v750, %v754
  %vm756 = vweird.f32 %v748
  %vm757 = vweird.f32 %v750
  %vm758 = vmor %vm756, %vm757
  %v759 = vsel %vm758, %v750, %v755
  %v760 = vrsqrt.pop %v749
  %v761 = vmul.f32 %v760, %v749
  %v762 = vmul.f32 %v761, %v760
  %v763 = vmul.f32 0.5, %v762
  %v764 = vsub.f32 1.5, %v763
  %v765 = vmul.f32 %v760, %v764
  %vm766 = vweird.f32 %v749
  %vm767 = vweird.f32 %v760
  %vm768 = vmor %vm766, %vm767
  %v769 = vsel %vm768, %v760, %v765
  %v770 = vmul.f32 %v736, %v759
  %v771 = vmul.f32 %v737, %v769
  %v772 = vperm.slane %v53, 4
  %v773 = vmul.f32 %v770, %v772
  %v774 = vmul.f32 %v771, %v772
  %v775 = vperm.slane %v53, 5
  %v776 = vadd.f32 %v773, %v775
  %v777 = vadd.f32 %v774, %v775
  %v778 = vld [vmem:[%s8] sm:$0xff]
  %v779 = vld [vmem:[%s8 + $0x8] sm:$0xff]
  %v780 = vld [vmem:[%s8 + $0x10] sm:$0xff]
  %v781 = vld [vmem:[%s8 + $0x18] sm:$0xff]
  %v782 = vperm.slane %v53, 0
  %v784 = vsel %vm70, %v776, 0
  %v787 = vsel %vm70, %v777, 0
  %789 = vmatpush.msra.mxu0 0.0
  %790 = vmatpush.msra.mxu0 0.0
  %791 = vmatpush.msra.mxu0 0.0
  %792 = vmatpush.msra.mxu0 0.0
  %793 = vmatpush.msra.mxu0 0.0
  %794 = vmatpush.msra.mxu0 0.0
  %795 = vmatpush.msra.mxu0 0.0
  %796 = vmatpush.msra.mxu0 0.0
  %797 = vmatpush.msra.mxu0 0.0
  %798 = vmatpush.msra.mxu0 0.0
  %799 = vmatpush.msra.mxu0 0.0
  %800 = vmatpush.msra.mxu0 0.0
  %801 = vmatpush.msra.mxu0 %v781
  %802 = vmatpush.msra.mxu0 %v780
  %803 = vmatpush.msra.mxu0 %v779
  %804 = vmatpush.msra.mxu0 %v778
  %805 = vmatmul.f32.gmra.mxu0 %v784
  %v806 = vpop.f32.mrf.mxu0
  %v807 = vadd.f32 %v782, %v806
  %808 = vmatmul.f32.gmra.mxu0 %v787
  %v809 = vpop.f32.mrf.mxu0
  %v810 = vadd.f32 %v782, %v809
  %811 = vdwg.mxu0
  %v812 = vld [vmem:[%s9] sm:$0xff]
  %v813 = vld [vmem:[%s9 + $0x8] sm:$0xff]
  %v814 = vld [vmem:[%s9 + $0x10] sm:$0xff]
  %v815 = vld [vmem:[%s9 + $0x18] sm:$0xff]
  %v816 = vld [vmem:[%s10] sm:$0x1]
  %v818 = vperm.slane %v816, 0
  %v821 = vsel %vm70, %v59, 0
  %v824 = vsel %vm70, %v61, 0
  %826 = vmatpush.msra.mxu0 0.0
  %827 = vmatpush.msra.mxu0 0.0
  %828 = vmatpush.msra.mxu0 0.0
  %829 = vmatpush.msra.mxu0 0.0
  %830 = vmatpush.msra.mxu0 0.0
  %831 = vmatpush.msra.mxu0 0.0
  %832 = vmatpush.msra.mxu0 0.0
  %833 = vmatpush.msra.mxu0 0.0
  %834 = vmatpush.msra.mxu0 0.0
  %835 = vmatpush.msra.mxu0 0.0
  %836 = vmatpush.msra.mxu0 0.0
  %837 = vmatpush.msra.mxu0 0.0
  %838 = vmatpush.msra.mxu0 %v815
  %839 = vmatpush.msra.mxu0 %v814
  %840 = vmatpush.msra.mxu0 %v813
  %841 = vmatpush.msra.mxu0 %v812
  %842 = vmatmul.f32.gmra.mxu0 %v821
  %v843 = vpop.f32.mrf.mxu0
  %v844 = vadd.f32 %v818, %v843
  %845 = vmatmul.f32.gmra.mxu0 %v824
  %v846 = vpop.f32.mrf.mxu0
  %v847 = vadd.f32 %v818, %v846
  %848 = vdwg.mxu0
  %v849 = vld [vmem:[%s4] sm:$0x1]
  %v850 = vmul.f32 %v849, -1e+09
  %v852 = vsel %vm109, %v807, 0
  %v855 = vsel %vm109, %v844, 0
  %857 = vmatpush.xpose.msra.mxu0 0.0
  %858 = vmatpush.xpose.msra.mxu0 0.0
  %859 = vmatpush.xpose.msra.mxu0 0.0
  %860 = vmatpush.xpose.msra.mxu0 0.0
  %861 = vmatpush.xpose.msra.mxu0 0.0
  %862 = vmatpush.xpose.msra.mxu0 0.0
  %863 = vmatpush.xpose.msra.mxu0 0.0
  %864 = vmatpush.xpose.msra.mxu0 0.0
  %865 = vmatpush.xpose.msra.mxu0 0.0
  %866 = vmatpush.xpose.msra.mxu0 0.0
  %867 = vmatpush.xpose.msra.mxu0 0.0
  %868 = vmatpush.xpose.msra.mxu0 0.0
  %869 = vmatpush.xpose.msra.mxu0 0.0
  %870 = vmatpush.xpose.msra.mxu0 0.0
  %871 = vmatpush.xpose.msra.mxu0 0.0
  %872 = vmatpush.xpose.msra.mxu0 %v855
  %873 = vmatmul.f32.gmra.mxu0 %v852
  %v874 = vpop.f32.mrf.mxu0
  %v875 = vadd.f32 0.0, %v874
  %876 = vdwg.mxu0
  %v877 = vmul.f32 %v875, 0.35355338
  %v879 = vperm.slane %v850, 0
  %v881 = vadd.f32 %v877, %v879
  %v882 = vsel %vm109, %v881, -inf
  %883 = vmax.xlane.f32.xlu0 %v882
  %v884 = vpop.xlane.xlu0 %883
  %v885 = vsub.f32 %v881, %v884
  %v886 = vmul.f32 %v885, 1.442695
  %v887 = vpow.pop %v886
  %v888 = vsel %vm109, %v887, 0.0
  %889 = vadd.xlane.f32.xlu0 %v888
  %v890 = vpop.xlane.xlu0 %889
  %v891 = vrcp.pop %v890
  %v892 = vmul.f32 %v887, %v891
  %893 = vrot.lane.b32.xlu0 %v844, 96
  %v894 = vpop.permute.xlu0 %893
  %v897 = vsel %vm109, %v892, 0
  %899 = vmatpush.msra.mxu0 0.0
  %900 = vmatpush.msra.mxu0 0.0
  %901 = vmatpush.msra.mxu0 0.0
  %902 = vmatpush.msra.mxu0 0.0
  %903 = vmatpush.msra.mxu0 0.0
  %904 = vmatpush.msra.mxu0 0.0
  %905 = vmatpush.msra.mxu0 0.0
  %906 = vmatpush.msra.mxu0 0.0
  %907 = vmatpush.msra.mxu0 0.0
  %908 = vmatpush.msra.mxu0 0.0
  %909 = vmatpush.msra.mxu0 0.0
  %910 = vmatpush.msra.mxu0 0.0
  %911 = vmatpush.msra.mxu0 0.0
  %912 = vmatpush.msra.mxu0 0.0
  %913 = vmatpush.msra.mxu0 0.0
  %914 = vmatpush.msra.mxu0 %v894
  %915 = vmatmul.f32.gmra.mxu0 %v897
  %v916 = vpop.f32.mrf.mxu0
  %v917 = vadd.f32 0.0, %v916
  %918 = vdwg.mxu0
  %919 = vst.msk [vmem:[#allocation2] sm:$0xff] %vm109, %v917
  %920 = vrot.lane.b32.xlu0 %v807, 120
  %v921 = vpop.permute.xlu0 %920
  %922 = vrot.lane.b32.xlu0 %v844, 120
  %v923 = vpop.permute.xlu0 %922
  %v924 = vsel %vm109, %v921, 0
  %v926 = vsel %vm109, %v923, 0
  %928 = vmatpush.xpose.msra.mxu0 0.0
  %929 = vmatpush.xpose.msra.mxu0 0.0
  %930 = vmatpush.xpose.msra.mxu0 0.0
  %931 = vmatpush.xpose.msra.mxu0 0.0
  %932 = vmatpush.xpose.msra.mxu0 0.0
  %933 = vmatpush.xpose.msra.mxu0 0.0
  %934 = vmatpush.xpose.msra.mxu0 0.0
  %935 = vmatpush.xpose.msra.mxu0 0.0
  %936 = vmatpush.xpose.msra.mxu0 0.0
  %937 = vmatpush.xpose.msra.mxu0 0.0
  %938 = vmatpush.xpose.msra.mxu0 0.0
  %939 = vmatpush.xpose.msra.mxu0 0.0
  %940 = vmatpush.xpose.msra.mxu0 0.0
  %941 = vmatpush.xpose.msra.mxu0 0.0
  %942 = vmatpush.xpose.msra.mxu0 0.0
  %943 = vmatpush.xpose.msra.mxu0 %v926
  %944 = vmatmul.f32.gmra.mxu0 %v924
  %v945 = vpop.f32.mrf.mxu0
  %v946 = vadd.f32 0.0, %v945
  %947 = vdwg.mxu0
  %v948 = vmul.f32 %v946, 0.35355338
  %v949 = vadd.f32 %v948, %v879
  %v950 = vsel %vm109, %v949, -inf
  %951 = vmax.xlane.f32.xlu0 %v950
  %v952 = vpop.xlane.xlu0 %951
  %v953 = vsub.f32 %v949, %v952
  %v954 = vmul.f32 %v953, 1.442695
  %v955 = vpow.pop %v954
  %v956 = vsel %vm109, %v955, 0.0
  %957 = vadd.xlane.f32.xlu0 %v956
  %v958 = vpop.xlane.xlu0 %957
  %v959 = vrcp.pop %v958
  %v960 = vmul.f32 %v955, %v959
  %961 = vrot.lane.b32.xlu0 %v844, 88
  %v962 = vpop.permute.xlu0 %961
  %v965 = vsel %vm109, %v960, 0
  %967 = vmatpush.msra.mxu0 0.0
  %968 = vmatpush.msra.mxu0 0.0
  %969 = vmatpush.msra.mxu0 0.0
  %970 = vmatpush.msra.mxu0 0.0
  %971 = vmatpush.msra.mxu0 0.0
  %972 = vmatpush.msra.mxu0 0.0
  %973 = vmatpush.msra.mxu0 0.0
  %974 = vmatpush.msra.mxu0 0.0
  %975 = vmatpush.msra.mxu0 0.0
  %976 = vmatpush.msra.mxu0 0.0
  %977 = vmatpush.msra.mxu0 0.0
  %978 = vmatpush.msra.mxu0 0.0
  %979 = vmatpush.msra.mxu0 0.0
  %980 = vmatpush.msra.mxu0 0.0
  %981 = vmatpush.msra.mxu0 0.0
  %982 = vmatpush.msra.mxu0 %v962
  %983 = vmatmul.f32.gmra.mxu0 %v965
  %v984 = vpop.f32.mrf.mxu0
  %v985 = vadd.f32 0.0, %v984
  %986 = vdwg.mxu0
  %988 = vrot.lane.b32.xlu0 %v985, 8
  %v989 = vpop.permute.xlu0 %988
  %991 = vst.msk [vmem:[#allocation2] sm:$0xff] %vm245, %v989
  %992 = vrot.lane.b32.xlu0 %v807, 112
  %v993 = vpop.permute.xlu0 %992
  %994 = vrot.lane.b32.xlu0 %v844, 112
  %v995 = vpop.permute.xlu0 %994
  %v996 = vsel %vm109, %v993, 0
  %v998 = vsel %vm109, %v995, 0
  %1000 = vmatpush.xpose.msra.mxu0 0.0
  %1001 = vmatpush.xpose.msra.mxu0 0.0
  %1002 = vmatpush.xpose.msra.mxu0 0.0
  %1003 = vmatpush.xpose.msra.mxu0 0.0
  %1004 = vmatpush.xpose.msra.mxu0 0.0
  %1005 = vmatpush.xpose.msra.mxu0 0.0
  %1006 = vmatpush.xpose.msra.mxu0 0.0
  %1007 = vmatpush.xpose.msra.mxu0 0.0
  %1008 = vmatpush.xpose.msra.mxu0 0.0
  %1009 = vmatpush.xpose.msra.mxu0 0.0
  %1010 = vmatpush.xpose.msra.mxu0 0.0
  %1011 = vmatpush.xpose.msra.mxu0 0.0
  %1012 = vmatpush.xpose.msra.mxu0 0.0
  %1013 = vmatpush.xpose.msra.mxu0 0.0
  %1014 = vmatpush.xpose.msra.mxu0 0.0
  %1015 = vmatpush.xpose.msra.mxu0 %v998
  %1016 = vmatmul.f32.gmra.mxu0 %v996
  %v1017 = vpop.f32.mrf.mxu0
  %v1018 = vadd.f32 0.0, %v1017
  %1019 = vdwg.mxu0
  %v1020 = vmul.f32 %v1018, 0.35355338
  %v1021 = vadd.f32 %v1020, %v879
  %v1022 = vsel %vm109, %v1021, -inf
  %1023 = vmax.xlane.f32.xlu0 %v1022
  %v1024 = vpop.xlane.xlu0 %1023
  %v1025 = vsub.f32 %v1021, %v1024
  %v1026 = vmul.f32 %v1025, 1.442695
  %v1027 = vpow.pop %v1026
  %v1028 = vsel %vm109, %v1027, 0.0
  %1029 = vadd.xlane.f32.xlu0 %v1028
  %v1030 = vpop.xlane.xlu0 %1029
  %v1031 = vrcp.pop %v1030
  %v1032 = vmul.f32 %v1027, %v1031
  %1033 = vrot.lane.b32.xlu0 %v844, 80
  %v1034 = vpop.permute.xlu0 %1033
  %v1037 = vsel %vm109, %v1032, 0
  %1039 = vmatpush.msra.mxu0 0.0
  %1040 = vmatpush.msra.mxu0 0.0
  %1041 = vmatpush.msra.mxu0 0.0
  %1042 = vmatpush.msra.mxu0 0.0
  %1043 = vmatpush.msra.mxu0 0.0
  %1044 = vmatpush.msra.mxu0 0.0
  %1045 = vmatpush.msra.mxu0 0.0
  %1046 = vmatpush.msra.mxu0 0.0
  %1047 = vmatpush.msra.mxu0 0.0
  %1048 = vmatpush.msra.mxu0 0.0
  %1049 = vmatpush.msra.mxu0 0.0
  %1050 = vmatpush.msra.mxu0 0.0
  %1051 = vmatpush.msra.mxu0 0.0
  %1052 = vmatpush.msra.mxu0 0.0
  %1053 = vmatpush.msra.mxu0 0.0
  %1054 = vmatpush.msra.mxu0 %v1034
  %1055 = vmatmul.f32.gmra.mxu0 %v1037
  %v1056 = vpop.f32.mrf.mxu0
  %v1057 = vadd.f32 0.0, %v1056
  %1058 = vdwg.mxu0
  %1060 = vrot.lane.b32.xlu0 %v1057, 16
  %v1061 = vpop.permute.xlu0 %1060
  %1063 = vst.msk [vmem:[#allocation2] sm:$0xff] %vm318, %v1061
  %1064 = vrot.lane.b32.xlu0 %v807, 104
  %v1065 = vpop.permute.xlu0 %1064
  %1066 = vrot.lane.b32.xlu0 %v844, 104
  %v1067 = vpop.permute.xlu0 %1066
  %v1068 = vsel %vm109, %v1065, 0
  %v1070 = vsel %vm109, %v1067, 0
  %1072 = vmatpush.xpose.msra.mxu0 0.0
  %1073 = vmatpush.xpose.msra.mxu0 0.0
  %1074 = vmatpush.xpose.msra.mxu0 0.0
  %1075 = vmatpush.xpose.msra.mxu0 0.0
  %1076 = vmatpush.xpose.msra.mxu0 0.0
  %1077 = vmatpush.xpose.msra.mxu0 0.0
  %1078 = vmatpush.xpose.msra.mxu0 0.0
  %1079 = vmatpush.xpose.msra.mxu0 0.0
  %1080 = vmatpush.xpose.msra.mxu0 0.0
  %1081 = vmatpush.xpose.msra.mxu0 0.0
  %1082 = vmatpush.xpose.msra.mxu0 0.0
  %1083 = vmatpush.xpose.msra.mxu0 0.0
  %1084 = vmatpush.xpose.msra.mxu0 0.0
  %1085 = vmatpush.xpose.msra.mxu0 0.0
  %1086 = vmatpush.xpose.msra.mxu0 0.0
  %1087 = vmatpush.xpose.msra.mxu0 %v1070
  %1088 = vmatmul.f32.gmra.mxu0 %v1068
  %v1089 = vpop.f32.mrf.mxu0
  %v1090 = vadd.f32 0.0, %v1089
  %1091 = vdwg.mxu0
  %v1092 = vmul.f32 %v1090, 0.35355338
  %v1093 = vadd.f32 %v1092, %v879
  %v1094 = vsel %vm109, %v1093, -inf
  %1095 = vmax.xlane.f32.xlu0 %v1094
  %v1096 = vpop.xlane.xlu0 %1095
  %v1097 = vsub.f32 %v1093, %v1096
  %v1098 = vmul.f32 %v1097, 1.442695
  %v1099 = vpow.pop %v1098
  %v1100 = vsel %vm109, %v1099, 0.0
  %1101 = vadd.xlane.f32.xlu0 %v1100
  %v1102 = vpop.xlane.xlu0 %1101
  %v1103 = vrcp.pop %v1102
  %v1104 = vmul.f32 %v1099, %v1103
  %1105 = vrot.lane.b32.xlu0 %v844, 72
  %v1106 = vpop.permute.xlu0 %1105
  %v1109 = vsel %vm109, %v1104, 0
  %1111 = vmatpush.msra.mxu0 0.0
  %1112 = vmatpush.msra.mxu0 0.0
  %1113 = vmatpush.msra.mxu0 0.0
  %1114 = vmatpush.msra.mxu0 0.0
  %1115 = vmatpush.msra.mxu0 0.0
  %1116 = vmatpush.msra.mxu0 0.0
  %1117 = vmatpush.msra.mxu0 0.0
  %1118 = vmatpush.msra.mxu0 0.0
  %1119 = vmatpush.msra.mxu0 0.0
  %1120 = vmatpush.msra.mxu0 0.0
  %1121 = vmatpush.msra.mxu0 0.0
  %1122 = vmatpush.msra.mxu0 0.0
  %1123 = vmatpush.msra.mxu0 0.0
  %1124 = vmatpush.msra.mxu0 0.0
  %1125 = vmatpush.msra.mxu0 0.0
  %1126 = vmatpush.msra.mxu0 %v1106
  %1127 = vmatmul.f32.gmra.mxu0 %v1109
  %v1128 = vpop.f32.mrf.mxu0
  %v1129 = vadd.f32 0.0, %v1128
  %1130 = vdwg.mxu0
  %1132 = vrot.lane.b32.xlu0 %v1129, 24
  %v1133 = vpop.permute.xlu0 %1132
  %1135 = vst.msk [vmem:[#allocation2] sm:$0xff] %vm391, %v1133
  %s1136 = scalar_lea.vmem %s4, 1
  %v1137 = vld [vmem:[%s1136] sm:$0x1]
  %v1138 = vmul.f32 %v1137, -1e+09
  %v1140 = vsel %vm109, %v810, 0
  %v1143 = vsel %vm109, %v847, 0
  %1145 = vmatpush.xpose.msra.mxu0 0.0
  %1146 = vmatpush.xpose.msra.mxu0 0.0
  %1147 = vmatpush.xpose.msra.mxu0 0.0
  %1148 = vmatpush.xpose.msra.mxu0 0.0
  %1149 = vmatpush.xpose.msra.mxu0 0.0
  %1150 = vmatpush.xpose.msra.mxu0 0.0
  %1151 = vmatpush.xpose.msra.mxu0 0.0
  %1152 = vmatpush.xpose.msra.mxu0 0.0
  %1153 = vmatpush.xpose.msra.mxu0 0.0
  %1154 = vmatpush.xpose.msra.mxu0 0.0
  %1155 = vmatpush.xpose.msra.mxu0 0.0
  %1156 = vmatpush.xpose.msra.mxu0 0.0
  %1157 = vmatpush.xpose.msra.mxu0 0.0
  %1158 = vmatpush.xpose.msra.mxu0 0.0
  %1159 = vmatpush.xpose.msra.mxu0 0.0
  %1160 = vmatpush.xpose.msra.mxu0 %v1143
  %1161 = vmatmul.f32.gmra.mxu0 %v1140
  %v1162 = vpop.f32.mrf.mxu0
  %v1163 = vadd.f32 0.0, %v1162
  %1164 = vdwg.mxu0
  %v1165 = vmul.f32 %v1163, 0.35355338
  %v1167 = vperm.slane %v1138, 0
  %v1169 = vadd.f32 %v1165, %v1167
  %v1170 = vsel %vm109, %v1169, -inf
  %1171 = vmax.xlane.f32.xlu0 %v1170
  %v1172 = vpop.xlane.xlu0 %1171
  %v1173 = vsub.f32 %v1169, %v1172
  %v1174 = vmul.f32 %v1173, 1.442695
  %v1175 = vpow.pop %v1174
  %v1176 = vsel %vm109, %v1175, 0.0
  %1177 = vadd.xlane.f32.xlu0 %v1176
  %v1178 = vpop.xlane.xlu0 %1177
  %v1179 = vrcp.pop %v1178
  %v1180 = vmul.f32 %v1175, %v1179
  %1181 = vrot.lane.b32.xlu0 %v847, 96
  %v1182 = vpop.permute.xlu0 %1181
  %v1185 = vsel %vm109, %v1180, 0
  %1187 = vmatpush.msra.mxu0 0.0
  %1188 = vmatpush.msra.mxu0 0.0
  %1189 = vmatpush.msra.mxu0 0.0
  %1190 = vmatpush.msra.mxu0 0.0
  %1191 = vmatpush.msra.mxu0 0.0
  %1192 = vmatpush.msra.mxu0 0.0
  %1193 = vmatpush.msra.mxu0 0.0
  %1194 = vmatpush.msra.mxu0 0.0
  %1195 = vmatpush.msra.mxu0 0.0
  %1196 = vmatpush.msra.mxu0 0.0
  %1197 = vmatpush.msra.mxu0 0.0
  %1198 = vmatpush.msra.mxu0 0.0
  %1199 = vmatpush.msra.mxu0 0.0
  %1200 = vmatpush.msra.mxu0 0.0
  %1201 = vmatpush.msra.mxu0 0.0
  %1202 = vmatpush.msra.mxu0 %v1182
  %1203 = vmatmul.f32.gmra.mxu0 %v1185
  %v1204 = vpop.f32.mrf.mxu0
  %v1205 = vadd.f32 0.0, %v1204
  %1206 = vdwg.mxu0
  %1207 = vst.msk [vmem:[#allocation2 + $0x8] sm:$0xff] %vm109, %v1205
  %1208 = vrot.lane.b32.xlu0 %v810, 120
  %v1209 = vpop.permute.xlu0 %1208
  %1210 = vrot.lane.b32.xlu0 %v847, 120
  %v1211 = vpop.permute.xlu0 %1210
  %v1212 = vsel %vm109, %v1209, 0
  %v1214 = vsel %vm109, %v1211, 0
  %1216 = vmatpush.xpose.msra.mxu0 0.0
  %1217 = vmatpush.xpose.msra.mxu0 0.0
  %1218 = vmatpush.xpose.msra.mxu0 0.0
  %1219 = vmatpush.xpose.msra.mxu0 0.0
  %1220 = vmatpush.xpose.msra.mxu0 0.0
  %1221 = vmatpush.xpose.msra.mxu0 0.0
  %1222 = vmatpush.xpose.msra.mxu0 0.0
  %1223 = vmatpush.xpose.msra.mxu0 0.0
  %1224 = vmatpush.xpose.msra.mxu0 0.0
  %1225 = vmatpush.xpose.msra.mxu0 0.0
  %1226 = vmatpush.xpose.msra.mxu0 0.0
  %1227 = vmatpush.xpose.msra.mxu0 0.0
  %1228 = vmatpush.xpose.msra.mxu0 0.0
  %1229 = vmatpush.xpose.msra.mxu0 0.0
  %1230 = vmatpush.xpose.msra.mxu0 0.0
  %1231 = vmatpush.xpose.msra.mxu0 %v1214
  %1232 = vmatmul.f32.gmra.mxu0 %v1212
  %v1233 = vpop.f32.mrf.mxu0
  %v1234 = vadd.f32 0.0, %v1233
  %1235 = vdwg.mxu0
  %v1236 = vmul.f32 %v1234, 0.35355338
  %v1237 = vadd.f32 %v1236, %v1167
  %v1238 = vsel %vm109, %v1237, -inf
  %1239 = vmax.xlane.f32.xlu0 %v1238
  %v1240 = vpop.xlane.xlu0 %1239
  %v1241 = vsub.f32 %v1237, %v1240
  %v1242 = vmul.f32 %v1241, 1.442695
  %v1243 = vpow.pop %v1242
  %v1244 = vsel %vm109, %v1243, 0.0
  %1245 = vadd.xlane.f32.xlu0 %v1244
  %v1246 = vpop.xlane.xlu0 %1245
  %v1247 = vrcp.pop %v1246
  %v1248 = vmul.f32 %v1243, %v1247
  %1249 = vrot.lane.b32.xlu0 %v847, 88
  %v1250 = vpop.permute.xlu0 %1249
  %v1253 = vsel %vm109, %v1248, 0
  %1255 = vmatpush.msra.mxu0 0.0
  %1256 = vmatpush.msra.mxu0 0.0
  %1257 = vmatpush.msra.mxu0 0.0
  %1258 = vmatpush.msra.mxu0 0.0
  %1259 = vmatpush.msra.mxu0 0.0
  %1260 = vmatpush.msra.mxu0 0.0
  %1261 = vmatpush.msra.mxu0 0.0
  %1262 = vmatpush.msra.mxu0 0.0
  %1263 = vmatpush.msra.mxu0 0.0
  %1264 = vmatpush.msra.mxu0 0.0
  %1265 = vmatpush.msra.mxu0 0.0
  %1266 = vmatpush.msra.mxu0 0.0
  %1267 = vmatpush.msra.mxu0 0.0
  %1268 = vmatpush.msra.mxu0 0.0
  %1269 = vmatpush.msra.mxu0 0.0
  %1270 = vmatpush.msra.mxu0 %v1250
  %1271 = vmatmul.f32.gmra.mxu0 %v1253
  %v1272 = vpop.f32.mrf.mxu0
  %v1273 = vadd.f32 0.0, %v1272
  %1274 = vdwg.mxu0
  %1276 = vrot.lane.b32.xlu0 %v1273, 8
  %v1277 = vpop.permute.xlu0 %1276
  %1279 = vst.msk [vmem:[#allocation2 + $0x8] sm:$0xff] %vm245, %v1277
  %1280 = vrot.lane.b32.xlu0 %v810, 112
  %v1281 = vpop.permute.xlu0 %1280
  %1282 = vrot.lane.b32.xlu0 %v847, 112
  %v1283 = vpop.permute.xlu0 %1282
  %v1284 = vsel %vm109, %v1281, 0
  %v1286 = vsel %vm109, %v1283, 0
  %1288 = vmatpush.xpose.msra.mxu0 0.0
  %1289 = vmatpush.xpose.msra.mxu0 0.0
  %1290 = vmatpush.xpose.msra.mxu0 0.0
  %1291 = vmatpush.xpose.msra.mxu0 0.0
  %1292 = vmatpush.xpose.msra.mxu0 0.0
  %1293 = vmatpush.xpose.msra.mxu0 0.0
  %1294 = vmatpush.xpose.msra.mxu0 0.0
  %1295 = vmatpush.xpose.msra.mxu0 0.0
  %1296 = vmatpush.xpose.msra.mxu0 0.0
  %1297 = vmatpush.xpose.msra.mxu0 0.0
  %1298 = vmatpush.xpose.msra.mxu0 0.0
  %1299 = vmatpush.xpose.msra.mxu0 0.0
  %1300 = vmatpush.xpose.msra.mxu0 0.0
  %1301 = vmatpush.xpose.msra.mxu0 0.0
  %1302 = vmatpush.xpose.msra.mxu0 0.0
  %1303 = vmatpush.xpose.msra.mxu0 %v1286
  %1304 = vmatmul.f32.gmra.mxu0 %v1284
  %v1305 = vpop.f32.mrf.mxu0
  %v1306 = vadd.f32 0.0, %v1305
  %1307 = vdwg.mxu0
  %v1308 = vmul.f32 %v1306, 0.35355338
  %v1309 = vadd.f32 %v1308, %v1167
  %v1310 = vsel %vm109, %v1309, -inf
  %1311 = vmax.xlane.f32.xlu0 %v1310
  %v1312 = vpop.xlane.xlu0 %1311
  %v1313 = vsub.f32 %v1309, %v1312
  %v1314 = vmul.f32 %v1313, 1.442695
  %v1315 = vpow.pop %v1314
  %v1316 = vsel %vm109, %v1315, 0.0
  %1317 = vadd.xlane.f32.xlu0 %v1316
  %v1318 = vpop.xlane.xlu0 %1317
  %v1319 = vrcp.pop %v1318
  %v1320 = vmul.f32 %v1315, %v1319
  %1321 = vrot.lane.b32.xlu0 %v847, 80
  %v1322 = vpop.permute.xlu0 %1321
  %v1325 = vsel %vm109, %v1320, 0
  %1327 = vmatpush.msra.mxu0 0.0
  %1328 = vmatpush.msra.mxu0 0.0
  %1329 = vmatpush.msra.mxu0 0.0
  %1330 = vmatpush.msra.mxu0 0.0
  %1331 = vmatpush.msra.mxu0 0.0
  %1332 = vmatpush.msra.mxu0 0.0
  %1333 = vmatpush.msra.mxu0 0.0
  %1334 = vmatpush.msra.mxu0 0.0
  %1335 = vmatpush.msra.mxu0 0.0
  %1336 = vmatpush.msra.mxu0 0.0
  %1337 = vmatpush.msra.mxu0 0.0
  %1338 = vmatpush.msra.mxu0 0.0
  %1339 = vmatpush.msra.mxu0 0.0
  %1340 = vmatpush.msra.mxu0 0.0
  %1341 = vmatpush.msra.mxu0 0.0
  %1342 = vmatpush.msra.mxu0 %v1322
  %1343 = vmatmul.f32.gmra.mxu0 %v1325
  %v1344 = vpop.f32.mrf.mxu0
  %v1345 = vadd.f32 0.0, %v1344
  %1346 = vdwg.mxu0
  %1348 = vrot.lane.b32.xlu0 %v1345, 16
  %v1349 = vpop.permute.xlu0 %1348
  %1351 = vst.msk [vmem:[#allocation2 + $0x8] sm:$0xff] %vm318, %v1349
  %1352 = vrot.lane.b32.xlu0 %v810, 104
  %v1353 = vpop.permute.xlu0 %1352
  %1354 = vrot.lane.b32.xlu0 %v847, 104
  %v1355 = vpop.permute.xlu0 %1354
  %v1356 = vsel %vm109, %v1353, 0
  %v1358 = vsel %vm109, %v1355, 0
  %1360 = vmatpush.xpose.msra.mxu0 0.0
  %1361 = vmatpush.xpose.msra.mxu0 0.0
  %1362 = vmatpush.xpose.msra.mxu0 0.0
  %1363 = vmatpush.xpose.msra.mxu0 0.0
  %1364 = vmatpush.xpose.msra.mxu0 0.0
  %1365 = vmatpush.xpose.msra.mxu0 0.0
  %1366 = vmatpush.xpose.msra.mxu0 0.0
  %1367 = vmatpush.xpose.msra.mxu0 0.0
  %1368 = vmatpush.xpose.msra.mxu0 0.0
  %1369 = vmatpush.xpose.msra.mxu0 0.0
  %1370 = vmatpush.xpose.msra.mxu0 0.0
  %1371 = vmatpush.xpose.msra.mxu0 0.0
  %1372 = vmatpush.xpose.msra.mxu0 0.0
  %1373 = vmatpush.xpose.msra.mxu0 0.0
  %1374 = vmatpush.xpose.msra.mxu0 0.0
  %1375 = vmatpush.xpose.msra.mxu0 %v1358
  %1376 = vmatmul.f32.gmra.mxu0 %v1356
  %v1377 = vpop.f32.mrf.mxu0
  %v1378 = vadd.f32 0.0, %v1377
  %1379 = vdwg.mxu0
  %v1380 = vmul.f32 %v1378, 0.35355338
  %v1381 = vadd.f32 %v1380, %v1167
  %v1382 = vsel %vm109, %v1381, -inf
  %1383 = vmax.xlane.f32.xlu0 %v1382
  %v1384 = vpop.xlane.xlu0 %1383
  %v1385 = vsub.f32 %v1381, %v1384
  %v1386 = vmul.f32 %v1385, 1.442695
  %v1387 = vpow.pop %v1386
  %v1388 = vsel %vm109, %v1387, 0.0
  %1389 = vadd.xlane.f32.xlu0 %v1388
  %v1390 = vpop.xlane.xlu0 %1389
  %v1391 = vrcp.pop %v1390
  %v1392 = vmul.f32 %v1387, %v1391
  %1393 = vrot.lane.b32.xlu0 %v847, 72
  %v1394 = vpop.permute.xlu0 %1393
  %v1397 = vsel %vm109, %v1392, 0
  %1399 = vmatpush.msra.mxu0 0.0
  %1400 = vmatpush.msra.mxu0 0.0
  %1401 = vmatpush.msra.mxu0 0.0
  %1402 = vmatpush.msra.mxu0 0.0
  %1403 = vmatpush.msra.mxu0 0.0
  %1404 = vmatpush.msra.mxu0 0.0
  %1405 = vmatpush.msra.mxu0 0.0
  %1406 = vmatpush.msra.mxu0 0.0
  %1407 = vmatpush.msra.mxu0 0.0
  %1408 = vmatpush.msra.mxu0 0.0
  %1409 = vmatpush.msra.mxu0 0.0
  %1410 = vmatpush.msra.mxu0 0.0
  %1411 = vmatpush.msra.mxu0 0.0
  %1412 = vmatpush.msra.mxu0 0.0
  %1413 = vmatpush.msra.mxu0 0.0
  %1414 = vmatpush.msra.mxu0 %v1394
  %1415 = vmatmul.f32.gmra.mxu0 %v1397
  %v1416 = vpop.f32.mrf.mxu0
  %v1417 = vadd.f32 0.0, %v1416
  %1418 = vdwg.mxu0
  %1420 = vrot.lane.b32.xlu0 %v1417, 24
  %v1421 = vpop.permute.xlu0 %1420
  %1423 = vst.msk [vmem:[#allocation2 + $0x8] sm:$0xff] %vm391, %v1421
  %v1424 = vld [vmem:[#allocation2] sm:$0xff]
  %v1425 = vld [vmem:[#allocation2 + $0x8] sm:$0xff]
  %v1426 = vld [vmem:[%s11] sm:$0xff]
  %v1427 = vld [vmem:[%s11 + $0x8] sm:$0xff]
  %v1428 = vld [vmem:[%s11 + $0x10] sm:$0xff]
  %v1429 = vld [vmem:[%s11 + $0x18] sm:$0xff]
  %v1430 = vperm.slane %v53, 2
  %v1432 = vsel %vm70, %v1424, 0
  %v1435 = vsel %vm70, %v1425, 0
  %1437 = vmatpush.msra.mxu0 0.0
  %1438 = vmatpush.msra.mxu0 0.0
  %1439 = vmatpush.msra.mxu0 0.0
  %1440 = vmatpush.msra.mxu0 0.0
  %1441 = vmatpush.msra.mxu0 0.0
  %1442 = vmatpush.msra.mxu0 0.0
  %1443 = vmatpush.msra.mxu0 0.0
  %1444 = vmatpush.msra.mxu0 0.0
  %1445 = vmatpush.msra.mxu0 0.0
  %1446 = vmatpush.msra.mxu0 0.0
  %1447 = vmatpush.msra.mxu0 0.0
  %1448 = vmatpush.msra.mxu0 0.0
  %1449 = vmatpush.msra.mxu0 %v1429
  %1450 = vmatpush.msra.mxu0 %v1428
  %1451 = vmatpush.msra.mxu0 %v1427
  %1452 = vmatpush.msra.mxu0 %v1426
  %1453 = vmatmul.f32.gmra.mxu0 %v1432
  %v1454 = vpop.f32.mrf.mxu0
  %v1455 = vadd.f32 %v1430, %v1454
  %1456 = vmatmul.f32.gmra.mxu0 %v1435
  %v1457 = vpop.f32.mrf.mxu0
  %v1458 = vadd.f32 %v1430, %v1457
  %1459 = vdwg.mxu0
  %v1460 = vadd.f32 %v776, %v1455
  %v1461 = vadd.f32 %v777, %v1458
  %v1462 = vsel %vm70, %v1460, 0.0
  %1463 = vadd.xlane.f32.xlu0 %v1462
  %v1464 = vpop.xlane.xlu0 %1463
  %v1465 = vsel %vm70, %v1461, 0.0
  %1466 = vadd.xlane.f32.xlu0 %v1465
  %v1467 = vpop.xlane.xlu0 %1466
  %v1468 = vmul.f32 %v1464, %v733
  %v1469 = vmul.f32 %v1467, %v733
  %v1470 = vsub.f32 %v1460, %v1468
  %v1471 = vsub.f32 %v1461, %v1469
  %v1472 = vmul.f32 %v1470, %v1470
  %v1473 = vmul.f32 %v1471, %v1471
  %v1474 = vsel %vm70, %v1472, 0.0
  %1475 = vadd.xlane.f32.xlu0 %v1474
  %v1476 = vpop.xlane.xlu0 %1475
  %v1477 = vsel %vm70, %v1473, 0.0
  %1478 = vadd.xlane.f32.xlu0 %v1477
  %v1479 = vpop.xlane.xlu0 %1478
  %v1480 = vmul.f32 %v1476, %v733
  %v1481 = vmul.f32 %v1479, %v733
  %v1482 = vadd.f32 %v1480, 1e-05
  %v1483 = vadd.f32 %v1481, 1e-05
  %v1484 = vrsqrt.pop %v1482
  %v1485 = vmul.f32 %v1484, %v1482
  %v1486 = vmul.f32 %v1485, %v1484
  %v1487 = vmul.f32 0.5, %v1486
  %v1488 = vsub.f32 1.5, %v1487
  %v1489 = vmul.f32 %v1484, %v1488
  %vm1490 = vweird.f32 %v1482
  %vm1491 = vweird.f32 %v1484
  %vm1492 = vmor %vm1490, %vm1491
  %v1493 = vsel %vm1492, %v1484, %v1489
  %v1494 = vrsqrt.pop %v1483
  %v1495 = vmul.f32 %v1494, %v1483
  %v1496 = vmul.f32 %v1495, %v1494
  %v1497 = vmul.f32 0.5, %v1496
  %v1498 = vsub.f32 1.5, %v1497
  %v1499 = vmul.f32 %v1494, %v1498
  %vm1500 = vweird.f32 %v1483
  %vm1501 = vweird.f32 %v1494
  %vm1502 = vmor %vm1500, %vm1501
  %v1503 = vsel %vm1502, %v1494, %v1499
  %v1504 = vmul.f32 %v1470, %v1493
  %v1505 = vmul.f32 %v1471, %v1503
  %v1506 = vperm.slane %v53, 6
  %v1507 = vmul.f32 %v1504, %v1506
  %v1508 = vmul.f32 %v1505, %v1506
  %v1509 = vperm.slane %v53, 7
  %v1510 = vadd.f32 %v1507, %v1509
  %v1511 = vadd.f32 %v1508, %v1509
  %v1512 = vld [vmem:[%s12] sm:$0xff]
  %v1513 = vld [vmem:[%s12 + $0x8] sm:$0xff]
  %v1514 = vld [vmem:[%s12 + $0x10] sm:$0xff]
  %v1515 = vld [vmem:[%s12 + $0x18] sm:$0xff]
  %v1516 = vld [vmem:[%s13] sm:$0x1]
  %v1518 = vperm.slane %v1516, 0
  %v1521 = vsel %vm70, %v1510, 0
  %v1524 = vsel %vm70, %v1511, 0
  %1526 = vmatpush.msra.mxu0 0.0
  %1527 = vmatpush.msra.mxu0 0.0
  %1528 = vmatpush.msra.mxu0 0.0
  %1529 = vmatpush.msra.mxu0 0.0
  %1530 = vmatpush.msra.mxu0 0.0
  %1531 = vmatpush.msra.mxu0 0.0
  %1532 = vmatpush.msra.mxu0 0.0
  %1533 = vmatpush.msra.mxu0 0.0
  %1534 = vmatpush.msra.mxu0 0.0
  %1535 = vmatpush.msra.mxu0 0.0
  %1536 = vmatpush.msra.mxu0 0.0
  %1537 = vmatpush.msra.mxu0 0.0
  %1538 = vmatpush.msra.mxu0 %v1515
  %1539 = vmatpush.msra.mxu0 %v1514
  %1540 = vmatpush.msra.mxu0 %v1513
  %1541 = vmatpush.msra.mxu0 %v1512
  %1542 = vmatmul.f32.gmra.mxu0 %v1521
  %v1543 = vpop.f32.mrf.mxu0
  %v1544 = vadd.f32 %v1518, %v1543
  %1545 = vmatmul.f32.gmra.mxu0 %v1524
  %v1546 = vpop.f32.mrf.mxu0
  %v1547 = vadd.f32 %v1518, %v1546
  %1548 = vdwg.mxu0
  %v1549 = vmax.f32 %v1544, 0.0
  %v1550 = vmax.f32 %v1547, 0.0
  %v1551 = vld [vmem:[%s14] sm:$0xff]
  %v1552 = vld [vmem:[%s14 + $0x8] sm:$0xff]
  %v1553 = vld [vmem:[%s14 + $0x10] sm:$0xff]
  %v1554 = vld [vmem:[%s14 + $0x18] sm:$0xff]
  %v1555 = vld [vmem:[%s14 + $0x20] sm:$0xff]
  %v1556 = vld [vmem:[%s14 + $0x28] sm:$0xff]
  %v1557 = vld [vmem:[%s14 + $0x30] sm:$0xff]
  %v1558 = vld [vmem:[%s14 + $0x38] sm:$0xff]
  %v1559 = vperm.slane %v53, 3
  %vm1560 = vcmask 523264
  %v1562 = vsel %vm1560, %v1549, 0
  %v1565 = vsel %vm1560, %v1550, 0
  %1567 = vmatpush.msra.mxu0 0.0
  %1568 = vmatpush.msra.mxu0 0.0
  %1569 = vmatpush.msra.mxu0 0.0
  %1570 = vmatpush.msra.mxu0 0.0
  %1571 = vmatpush.msra.mxu0 0.0
  %1572 = vmatpush.msra.mxu0 0.0
  %1573 = vmatpush.msra.mxu0 0.0
  %1574 = vmatpush.msra.mxu0 0.0
  %1575 = vmatpush.msra.mxu0 %v1558
  %1576 = vmatpush.msra.mxu0 %v1557
  %1577 = vmatpush.msra.mxu0 %v1556
  %1578 = vmatpush.msra.mxu0 %v1555
  %1579 = vmatpush.msra.mxu0 %v1554
  %1580 = vmatpush.msra.mxu0 %v1553
  %1581 = vmatpush.msra.mxu0 %v1552
  %1582 = vmatpush.msra.mxu0 %v1551
  %1583 = vmatmul.f32.gmra.mxu0 %v1562
  %v1584 = vpop.f32.mrf.mxu0
  %v1585 = vadd.f32 %v1559, %v1584
  %1586 = vmatmul.f32.gmra.mxu0 %v1565
  %v1587 = vpop.f32.mrf.mxu0
  %v1588 = vadd.f32 %v1559, %v1587
  %1589 = vdwg.mxu0
  %v1590 = vadd.f32 %v1510, %v1585
  %v1591 = vadd.f32 %v1511, %v1588
  %v1592 = vsel %vm70, %v1590, 0.0
  %1593 = vadd.xlane.f32.xlu0 %v1592
  %v1594 = vpop.xlane.xlu0 %1593
  %v1595 = vsel %vm70, %v1591, 0.0
  %1596 = vadd.xlane.f32.xlu0 %v1595
  %v1597 = vpop.xlane.xlu0 %1596
  %v1598 = vmul.f32 %v1594, %v733
  %v1599 = vmul.f32 %v1597, %v733
  %v1600 = vsub.f32 %v1590, %v1598
  %v1601 = vsub.f32 %v1591, %v1599
  %v1602 = vmul.f32 %v1600, %v1600
  %v1603 = vmul.f32 %v1601, %v1601
  %v1604 = vsel %vm70, %v1602, 0.0
  %1605 = vadd.xlane.f32.xlu0 %v1604
  %v1606 = vpop.xlane.xlu0 %1605
  %v1607 = vsel %vm70, %v1603, 0.0
  %1608 = vadd.xlane.f32.xlu0 %v1607
  %v1609 = vpop.xlane.xlu0 %1608
  %v1610 = vmul.f32 %v1606, %v733
  %v1611 = vmul.f32 %v1609, %v733
  %v1612 = vadd.f32 %v1610, 1e-05
  %v1613 = vadd.f32 %v1611, 1e-05
  %v1614 = vrsqrt.pop %v1612
  %v1615 = vmul.f32 %v1614, %v1612
  %v1616 = vmul.f32 %v1615, %v1614
  %v1617 = vmul.f32 0.5, %v1616
  %v1618 = vsub.f32 1.5, %v1617
  %v1619 = vmul.f32 %v1614, %v1618
  %vm1620 = vweird.f32 %v1612
  %vm1621 = vweird.f32 %v1614
  %vm1622 = vmor %vm1620, %vm1621
  %v1623 = vsel %vm1622, %v1614, %v1619
  %v1624 = vrsqrt.pop %v1613
  %v1625 = vmul.f32 %v1624, %v1613
  %v1626 = vmul.f32 %v1625, %v1624
  %v1627 = vmul.f32 0.5, %v1626
  %v1628 = vsub.f32 1.5, %v1627
  %v1629 = vmul.f32 %v1624, %v1628
  %vm1630 = vweird.f32 %v1613
  %vm1631 = vweird.f32 %v1624
  %vm1632 = vmor %vm1630, %vm1631
  %v1633 = vsel %vm1632, %v1624, %v1629
  %v1634 = vmul.f32 %v1600, %v1623
  %v1635 = vmul.f32 %v1601, %v1633
  %v1636 = vperm.slane %v54, 0
  %v1637 = vmul.f32 %v1634, %v1636
  %v1638 = vmul.f32 %v1635, %v1636
  %v1639 = vperm.slane %v54, 1
  %v1640 = vadd.f32 %v1637, %v1639
  %v1641 = vadd.f32 %v1638, %v1639
  %1642 = vst.msk [vmem:[%s16] sm:$0xff] %vm70, %v1640
  %s1643 = scalar_lea.vmem %s16, 8
  %1644 = vst.msk [vmem:[%s1643] sm:$0xff] %vm70, %v1641
  // Predicated region
  $region66: #{custom_decoder_layer.1} parent=0 // pred_check
    _
  $region67: #{custom_decoder_layer.1} parent=0 // pred_check_branch
    %1646 = sbr.rel (0) target = $region69
  $region68: #{custom_decoder_layer.1} parent=0 // pred_region
    _
  $region69: #{custom_decoder_layer.1} parent=0 // pred_fallthru
    _
  // Predicated region
  $region70: #{custom_decoder_layer.1} parent=0 // pred_check
    _
  $region71: #{custom_decoder_layer.1} parent=0 // pred_check_branch
    %1648 = sbr.rel (0) target = $region73
  $region72: #{custom_decoder_layer.1} parent=0 // pred_region
    _
  $region73: #{custom_decoder_layer.1} parent=0 // pred_fallthru
    _

</llo_original>
